<compile_context>
chip_gen: v6e
topology: v6e:2x2x1
jax: 0.10.0
libtpu: 0.0.40
codegen_flags: <defaults>
</compile_context>

<pallas_src>
import jax
import jax.numpy as jnp
from jax import lax
from jax.experimental import pallas as pl
from jax.experimental.pallas import tpu as pltpu


_VMEM_BUDGET = 48 * 1024 * 1024   # per-block working-set budget: safe on v7x (64 MiB
                                  # physical VMEM); v5e/v6e (128 MiB) have headroom.


def _seq_attention_kernel(x_ref, wih_ref, whh_ref, b_ref, att_ref, out_ref, xw_ref):
    # x_ref  : [T, b_blk, D]   (original (T, B, D) HBM layout, no wrapper transpose)
    # att_ref: [b_blk, T_att, H]
    # out_ref: [b_blk, T_att]
    # xw_ref : VMEM scratch [T, b_blk, H]
    t_enc, b_blk, _ = x_ref.shape
    H = whh_ref.shape[1]
    unroll = True if t_enc <= 16 else 4

    # --- encoder phase 1: hoisted input projection (off the serial chain) ---------
    # T independent [b_blk, D] @ [D, H] MXU matmuls; with b_blk = 128/256 each one
    # fills the MXU and none of them sit on the recurrence's serial dependency.
    wih = wih_ref[...]
    bias = b_ref[...]

    def proj_step(t, carry):
        xw_ref[t] = (jnp.dot(x_ref[t], wih, preferred_element_type=jnp.float32)
                     + bias)
        return carry

    lax.fori_loop(0, t_enc, proj_step, 0, unroll=unroll)

    # --- encoder phase 2: serial tanh recurrence, h resident in vregs -------------
    whh = whh_ref[...]                                   # load W_hh once

    def rec_step(t, h):
        return jnp.tanh(jnp.dot(h, whh, preferred_element_type=jnp.float32)
                        + xw_ref[t])

    h = lax.fori_loop(0, t_enc, rec_step,
                      jnp.zeros((b_blk, H), jnp.float32), unroll=unroll)

    # --- attention: VPU broadcast-multiply + lane reduce + exact softmax ----------
    # Per-batch score is an (att[b] @ h[b]) matvec -> batched M=1 on the MXU, so the
    # VPU/XLU path (otherwise idle in this HBM-bound phase) is used instead.
    att = att_ref[...].astype(jnp.float32)
    scores = jnp.sum(h[:, None, :] * att, axis=-1)       # [b_blk, T_att]
    m = jnp.max(scores, axis=-1, keepdims=True)
    e = jnp.exp(scores - m)
    denom = jnp.sum(e, axis=-1, keepdims=True)
    out_ref[...] = e / denom                             # exact normalization


def _block_vmem_bytes(b_blk, t_enc, t_att, d_in, h_dim):
    # 2x double-buffered x & att tiles + out tile, weights (x2 buffers),
    # xw scratch, and the [b_blk, T_att, H] product temporary in the score reduce.
    return 4 * (2 * t_enc * b_blk * d_in
                + 3 * b_blk * t_att * h_dim
                + 2 * b_blk * t_att
                + 2 * (d_in * h_dim + h_dim * h_dim + h_dim)
                + t_enc * b_blk * h_dim)


def _pick_batch_block(B, t_enc, t_att, d_in, h_dim):
    cands = [bb for bb in range(8, min(B, 256) + 1, 8)
             if B % bb == 0
             and _block_vmem_bytes(bb, t_enc, t_att, d_in, h_dim) <= _VMEM_BUDGET]
    if not cands:
        # B < 8 or no multiple-of-8 divisor: one block covering the whole batch.
        # TODO(synk): for very large ragged batches, pad B up to a multiple of 8.
        return B
    best = max(cands)
    # v7x has 2 TensorCores: prefer >= 2 grid blocks when that keeps the block at an
    # MXU-filling 128+ rows (on v5e/v6e one big block is a pure win, so don't shrink
    # below 128 just to split).
    multi = [bb for bb in cands if B // bb >= 2]
    if B // best < 2 and multi and max(multi) >= 128:
        best = max(multi)
    return best


def seq_and_attention(enc_input, w_ih, w_hh, b, att_input):
    T, B, D = enc_input.shape
    H = w_ih.shape[1]
    T_att = att_input.shape[1]

    b_blk = _pick_batch_block(B, T, T_att, D, H)
    n_blk = B // b_blk

    flops = 2 * T * B * D * H + 2 * T * B * H * H + 2 * B * T_att * H
    transcendentals = T * B * H + B * T_att
    bytes_accessed = 4 * (T * B * D + D * H + H * H + H
                          + B * T_att * H + B * T_att)

    return pl.pallas_call(
        _seq_attention_kernel,
        out_shape=jax.ShapeDtypeStruct((B, T_att), jnp.float32),
        grid=(n_blk,),
        in_specs=[
            # enc_input stays in its original (T, B, D) layout; batch is tiled directly.
            pl.BlockSpec((T, b_blk, D), lambda i: (0, i, 0)),
            pl.BlockSpec((D, H), lambda i: (0, 0)),
            pl.BlockSpec((H, H), lambda i: (0, 0)),
            pl.BlockSpec((1, H), lambda i: (0, 0)),
            # att_input unpadded: full (T_att, H) trailing block per batch tile.
            pl.BlockSpec((b_blk, T_att, H), lambda i: (i, 0, 0)),
        ],
        out_specs=pl.BlockSpec((b_blk, T_att), lambda i: (i, 0)),
        scratch_shapes=[pltpu.VMEM((T, b_blk, H), jnp.float32)],
        compiler_params=pltpu.CompilerParams(
            dimension_semantics=("parallel",),
            vmem_limit_bytes=_VMEM_BUDGET),
        cost_estimate=pl.CostEstimate(
            flops=int(flops),
            transcendentals=int(transcendentals),
            bytes_accessed=int(bytes_accessed)),
    )(enc_input, w_ih, w_hh, b, att_input)


def _reference(enc_input, w_ih, w_hh, b, att_input):
    """Pure-JAX reference of the same forward pass."""
    T, B, _ = enc_input.shape
    h = jnp.zeros((B, w_ih.shape[1]), jnp.float32)
    for t in range(T):
        h = jnp.tanh(enc_input[t] @ w_ih + h @ w_hh + b)
    scores = jnp.einsum("bh,bth->bt", h, att_input)
    return jax.nn.softmax(scores, axis=-1)


if __name__ == "__main__":
    # Small shapes consistent with the forward pass.
    T_enc, B, D_in, H, T_att = 8, 2, 16, 32, 8

    key = jax.random.PRNGKey(0)
    k1, k2, k3, k4, k5 = jax.random.split(key, 5)

    enc_input = jax.random.normal(k1, (T_enc, B, D_in), jnp.float32)
    att_input = jax.random.normal(k2, (B, T_att, H), jnp.float32)

    # Deterministic parameter init (nn.RNN-style uniform scale).
    scale = 1.0 / jnp.sqrt(H)
    w_ih = jax.random.uniform(k3, (D_in, H), jnp.float32, -scale, scale)
    w_hh = jax.random.uniform(k4, (H, H), jnp.float32, -scale, scale)
    b = jax.random.uniform(k5, (1, H), jnp.float32, -scale, scale)

    out = jax.block_until_ready(seq_and_attention(enc_input, w_ih, w_hh, b, att_input))
    ref = _reference(enc_input, w_ih, w_hh, b, att_input)

    assert out.shape == (B, T_att)
    assert jnp.allclose(out, ref, atol=1e-3, rtol=1e-3), "mismatch vs JAX reference"
    assert jnp.allclose(jnp.sum(out, axis=-1), 1.0, atol=1e-4), "softmax rows must sum to 1"

    print("KERNEL_OK")
</pallas_src>

<mosaic_0001>
module attributes {stable_mosaic.version = 11 : i64} {
  func.func @_seq_attention_kernel(%arg0: i32, %arg1: memref<8x2x16xf32, #tpu.memory_space<vmem>>, %arg2: memref<16x32xf32, #tpu.memory_space<vmem>>, %arg3: memref<32x32xf32, #tpu.memory_space<vmem>>, %arg4: memref<1x32xf32, #tpu.memory_space<vmem>>, %arg5: memref<2x8x32xf32, #tpu.memory_space<vmem>>, %arg6: memref<2x8xf32, #tpu.memory_space<vmem>>, %arg7: memref<8x2x32xf32, #tpu.memory_space<vmem>>) attributes {dimension_semantics = [#tpu.dimension_semantics<parallel>], iteration_bounds = array<i64: 1>, scalar_prefetch = 0 : i64, scratch_operands = 1 : i64, tpu.core_type = #tpu.core_type<tc>, window_params = [{transform_indices = @transform_0, window_bounds = array<i64: 8, 2, 16>}, {pipeline_mode = #tpu.pipeline_mode<synchronous>, transform_indices = @transform_1, window_bounds = array<i64: 16, 32>}, {pipeline_mode = #tpu.pipeline_mode<synchronous>, transform_indices = @transform_2, window_bounds = array<i64: 32, 32>}, {pipeline_mode = #tpu.pipeline_mode<synchronous>, transform_indices = @transform_3, window_bounds = array<i64: 1, 32>}, {transform_indices = @transform_4, window_bounds = array<i64: 2, 8, 32>}, {transform_indices = @transform_5, window_bounds = array<i64: 2, 8>}]} {
    %c0 = arith.constant 0 : index
    %c0_0 = arith.constant 0 : index
    %0 = vector.load %arg2[%c0, %c0_0] : memref<16x32xf32, #tpu.memory_space<vmem>>, vector<16x32xf32>
    %c0_1 = arith.constant 0 : index
    %c0_2 = arith.constant 0 : index
    %1 = vector.load %arg4[%c0_1, %c0_2] : memref<1x32xf32, #tpu.memory_space<vmem>>, vector<1x32xf32>
    %c0_i32 = arith.constant 0 : i32
    %2 = arith.index_cast %c0_i32 : i32 to index
    %c0_3 = arith.constant 0 : index
    %c0_4 = arith.constant 0 : index
    %3 = vector.load %arg1[%2, %c0_3, %c0_4] : memref<8x2x16xf32, #tpu.memory_space<vmem>>, vector<1x2x16xf32>
    %4 = vector.shape_cast %3 : vector<1x2x16xf32> to vector<2x16xf32>
    %cst = arith.constant dense<0.000000e+00> : vector<2x32xf32>
    %5 = tpu.matmul %4, %0, %cst {dimension_numbers = #tpu.dot_dimension_numbers<[1], [0], [0], [1], [0, 0, 1, 1], [], []>} : vector<2x16xf32>, vector<16x32xf32>, vector<2x32xf32> -> vector<2x32xf32>
    %6 = vector.broadcast %1 : vector<1x32xf32> to vector<2x32xf32>
    %7 = arith.addf %5, %6 : vector<2x32xf32>
    %8 = arith.index_cast %c0_i32 : i32 to index
    %c0_5 = arith.constant 0 : index
    %c0_6 = arith.constant 0 : index
    %9 = vector.load %arg7[%8, %c0_5, %c0_6] : memref<8x2x32xf32, #tpu.memory_space<vmem>>, vector<1x2x32xf32>
    %10 = vector.shape_cast %9 : vector<1x2x32xf32> to vector<2x32xf32>
    %11 = vector.shape_cast %7 : vector<2x32xf32> to vector<1x2x32xf32>
    tpu.vector_store %arg7[%8, %c0_5, %c0_6], %11 {strides = array<i32>} : memref<8x2x32xf32, #tpu.memory_space<vmem>>, vector<1x2x32xf32>,
    %c1_i32 = arith.constant 1 : i32
    %12 = arith.index_cast %c1_i32 : i32 to index
    %c0_7 = arith.constant 0 : index
    %c0_8 = arith.constant 0 : index
    %13 = vector.load %arg1[%12, %c0_7, %c0_8] : memref<8x2x16xf32, #tpu.memory_space<vmem>>, vector<1x2x16xf32>
    %14 = vector.shape_cast %13 : vector<1x2x16xf32> to vector<2x16xf32>
    %cst_9 = arith.constant dense<0.000000e+00> : vector<2x32xf32>
    %15 = tpu.matmul %14, %0, %cst_9 {dimension_numbers = #tpu.dot_dimension_numbers<[1], [0], [0], [1], [0, 0, 1, 1], [], []>} : vector<2x16xf32>, vector<16x32xf32>, vector<2x32xf32> -> vector<2x32xf32>
    %16 = vector.broadcast %1 : vector<1x32xf32> to vector<2x32xf32>
    %17 = arith.addf %15, %16 : vector<2x32xf32>
    %18 = arith.index_cast %c1_i32 : i32 to index
    %c0_10 = arith.constant 0 : index
    %c0_11 = arith.constant 0 : index
    %19 = vector.load %arg7[%18, %c0_10, %c0_11] : memref<8x2x32xf32, #tpu.memory_space<vmem>>, vector<1x2x32xf32>
    %20 = vector.shape_cast %19 : vector<1x2x32xf32> to vector<2x32xf32>
    %21 = vector.shape_cast %17 : vector<2x32xf32> to vector<1x2x32xf32>
    tpu.vector_store %arg7[%18, %c0_10, %c0_11], %21 {strides = array<i32>} : memref<8x2x32xf32, #tpu.memory_space<vmem>>, vector<1x2x32xf32>,
    %c2_i32 = arith.constant 2 : i32
    %22 = arith.index_cast %c2_i32 : i32 to index
    %c0_12 = arith.constant 0 : index
    %c0_13 = arith.constant 0 : index
    %23 = vector.load %arg1[%22, %c0_12, %c0_13] : memref<8x2x16xf32, #tpu.memory_space<vmem>>, vector<1x2x16xf32>
    %24 = vector.shape_cast %23 : vector<1x2x16xf32> to vector<2x16xf32>
    %cst_14 = arith.constant dense<0.000000e+00> : vector<2x32xf32>
    %25 = tpu.matmul %24, %0, %cst_14 {dimension_numbers = #tpu.dot_dimension_numbers<[1], [0], [0], [1], [0, 0, 1, 1], [], []>} : vector<2x16xf32>, vector<16x32xf32>, vector<2x32xf32> -> vector<2x32xf32>
    %26 = vector.broadcast %1 : vector<1x32xf32> to vector<2x32xf32>
    %27 = arith.addf %25, %26 : vector<2x32xf32>
    %28 = arith.index_cast %c2_i32 : i32 to index
    %c0_15 = arith.constant 0 : index
    %c0_16 = arith.constant 0 : index
    %29 = vector.load %arg7[%28, %c0_15, %c0_16] : memref<8x2x32xf32, #tpu.memory_space<vmem>>, vector<1x2x32xf32>
    %30 = vector.shape_cast %29 : vector<1x2x32xf32> to vector<2x32xf32>
    %31 = vector.shape_cast %27 : vector<2x32xf32> to vector<1x2x32xf32>
    tpu.vector_store %arg7[%28, %c0_15, %c0_16], %31 {strides = array<i32>} : memref<8x2x32xf32, #tpu.memory_space<vmem>>, vector<1x2x32xf32>,
    %c3_i32 = arith.constant 3 : i32
    %32 = arith.index_cast %c3_i32 : i32 to index
    %c0_17 = arith.constant 0 : index
    %c0_18 = arith.constant 0 : index
    %33 = vector.load %arg1[%32, %c0_17, %c0_18] : memref<8x2x16xf32, #tpu.memory_space<vmem>>, vector<1x2x16xf32>
    %34 = vector.shape_cast %33 : vector<1x2x16xf32> to vector<2x16xf32>
    %cst_19 = arith.constant dense<0.000000e+00> : vector<2x32xf32>
    %35 = tpu.matmul %34, %0, %cst_19 {dimension_numbers = #tpu.dot_dimension_numbers<[1], [0], [0], [1], [0, 0, 1, 1], [], []>} : vector<2x16xf32>, vector<16x32xf32>, vector<2x32xf32> -> vector<2x32xf32>
    %36 = vector.broadcast %1 : vector<1x32xf32> to vector<2x32xf32>
    %37 = arith.addf %35, %36 : vector<2x32xf32>
    %38 = arith.index_cast %c3_i32 : i32 to index
    %c0_20 = arith.constant 0 : index
    %c0_21 = arith.constant 0 : index
    %39 = vector.load %arg7[%38, %c0_20, %c0_21] : memref<8x2x32xf32, #tpu.memory_space<vmem>>, vector<1x2x32xf32>
    %40 = vector.shape_cast %39 : vector<1x2x32xf32> to vector<2x32xf32>
    %41 = vector.shape_cast %37 : vector<2x32xf32> to vector<1x2x32xf32>
    tpu.vector_store %arg7[%38, %c0_20, %c0_21], %41 {strides = array<i32>} : memref<8x2x32xf32, #tpu.memory_space<vmem>>, vector<1x2x32xf32>,
    %c4_i32 = arith.constant 4 : i32
    %42 = arith.index_cast %c4_i32 : i32 to index
    %c0_22 = arith.constant 0 : index
    %c0_23 = arith.constant 0 : index
    %43 = vector.load %arg1[%42, %c0_22, %c0_23] : memref<8x2x16xf32, #tpu.memory_space<vmem>>, vector<1x2x16xf32>
    %44 = vector.shape_cast %43 : vector<1x2x16xf32> to vector<2x16xf32>
    %cst_24 = arith.constant dense<0.000000e+00> : vector<2x32xf32>
    %45 = tpu.matmul %44, %0, %cst_24 {dimension_numbers = #tpu.dot_dimension_numbers<[1], [0], [0], [1], [0, 0, 1, 1], [], []>} : vector<2x16xf32>, vector<16x32xf32>, vector<2x32xf32> -> vector<2x32xf32>
    %46 = vector.broadcast %1 : vector<1x32xf32> to vector<2x32xf32>
    %47 = arith.addf %45, %46 : vector<2x32xf32>
    %48 = arith.index_cast %c4_i32 : i32 to index
    %c0_25 = arith.constant 0 : index
    %c0_26 = arith.constant 0 : index
    %49 = vector.load %arg7[%48, %c0_25, %c0_26] : memref<8x2x32xf32, #tpu.memory_space<vmem>>, vector<1x2x32xf32>
    %50 = vector.shape_cast %49 : vector<1x2x32xf32> to vector<2x32xf32>
    %51 = vector.shape_cast %47 : vector<2x32xf32> to vector<1x2x32xf32>
    tpu.vector_store %arg7[%48, %c0_25, %c0_26], %51 {strides = array<i32>} : memref<8x2x32xf32, #tpu.memory_space<vmem>>, vector<1x2x32xf32>,
    %c5_i32 = arith.constant 5 : i32
    %52 = arith.index_cast %c5_i32 : i32 to index
    %c0_27 = arith.constant 0 : index
    %c0_28 = arith.constant 0 : index
    %53 = vector.load %arg1[%52, %c0_27, %c0_28] : memref<8x2x16xf32, #tpu.memory_space<vmem>>, vector<1x2x16xf32>
    %54 = vector.shape_cast %53 : vector<1x2x16xf32> to vector<2x16xf32>
    %cst_29 = arith.constant dense<0.000000e+00> : vector<2x32xf32>
    %55 = tpu.matmul %54, %0, %cst_29 {dimension_numbers = #tpu.dot_dimension_numbers<[1], [0], [0], [1], [0, 0, 1, 1], [], []>} : vector<2x16xf32>, vector<16x32xf32>, vector<2x32xf32> -> vector<2x32xf32>
    %56 = vector.broadcast %1 : vector<1x32xf32> to vector<2x32xf32>
    %57 = arith.addf %55, %56 : vector<2x32xf32>
    %58 = arith.index_cast %c5_i32 : i32 to index
    %c0_30 = arith.constant 0 : index
    %c0_31 = arith.constant 0 : index
    %59 = vector.load %arg7[%58, %c0_30, %c0_31] : memref<8x2x32xf32, #tpu.memory_space<vmem>>, vector<1x2x32xf32>
    %60 = vector.shape_cast %59 : vector<1x2x32xf32> to vector<2x32xf32>
    %61 = vector.shape_cast %57 : vector<2x32xf32> to vector<1x2x32xf32>
    tpu.vector_store %arg7[%58, %c0_30, %c0_31], %61 {strides = array<i32>} : memref<8x2x32xf32, #tpu.memory_space<vmem>>, vector<1x2x32xf32>,
    %c6_i32 = arith.constant 6 : i32
    %62 = arith.index_cast %c6_i32 : i32 to index
    %c0_32 = arith.constant 0 : index
    %c0_33 = arith.constant 0 : index
    %63 = vector.load %arg1[%62, %c0_32, %c0_33] : memref<8x2x16xf32, #tpu.memory_space<vmem>>, vector<1x2x16xf32>
    %64 = vector.shape_cast %63 : vector<1x2x16xf32> to vector<2x16xf32>
    %cst_34 = arith.constant dense<0.000000e+00> : vector<2x32xf32>
    %65 = tpu.matmul %64, %0, %cst_34 {dimension_numbers = #tpu.dot_dimension_numbers<[1], [0], [0], [1], [0, 0, 1, 1], [], []>} : vector<2x16xf32>, vector<16x32xf32>, vector<2x32xf32> -> vector<2x32xf32>
    %66 = vector.broadcast %1 : vector<1x32xf32> to vector<2x32xf32>
    %67 = arith.addf %65, %66 : vector<2x32xf32>
    %68 = arith.index_cast %c6_i32 : i32 to index
    %c0_35 = arith.constant 0 : index
    %c0_36 = arith.constant 0 : index
    %69 = vector.load %arg7[%68, %c0_35, %c0_36] : memref<8x2x32xf32, #tpu.memory_space<vmem>>, vector<1x2x32xf32>
    %70 = vector.shape_cast %69 : vector<1x2x32xf32> to vector<2x32xf32>
    %71 = vector.shape_cast %67 : vector<2x32xf32> to vector<1x2x32xf32>
    tpu.vector_store %arg7[%68, %c0_35, %c0_36], %71 {strides = array<i32>} : memref<8x2x32xf32, #tpu.memory_space<vmem>>, vector<1x2x32xf32>,
    %c7_i32 = arith.constant 7 : i32
    %72 = arith.index_cast %c7_i32 : i32 to index
    %c0_37 = arith.constant 0 : index
    %c0_38 = arith.constant 0 : index
    %73 = vector.load %arg1[%72, %c0_37, %c0_38] : memref<8x2x16xf32, #tpu.memory_space<vmem>>, vector<1x2x16xf32>
    %74 = vector.shape_cast %73 : vector<1x2x16xf32> to vector<2x16xf32>
    %cst_39 = arith.constant dense<0.000000e+00> : vector<2x32xf32>
    %75 = tpu.matmul %74, %0, %cst_39 {dimension_numbers = #tpu.dot_dimension_numbers<[1], [0], [0], [1], [0, 0, 1, 1], [], []>} : vector<2x16xf32>, vector<16x32xf32>, vector<2x32xf32> -> vector<2x32xf32>
    %76 = vector.broadcast %1 : vector<1x32xf32> to vector<2x32xf32>
    %77 = arith.addf %75, %76 : vector<2x32xf32>
    %78 = arith.index_cast %c7_i32 : i32 to index
    %c0_40 = arith.constant 0 : index
    %c0_41 = arith.constant 0 : index
    %79 = vector.load %arg7[%78, %c0_40, %c0_41] : memref<8x2x32xf32, #tpu.memory_space<vmem>>, vector<1x2x32xf32>
    %80 = vector.shape_cast %79 : vector<1x2x32xf32> to vector<2x32xf32>
    %81 = vector.shape_cast %77 : vector<2x32xf32> to vector<1x2x32xf32>
    tpu.vector_store %arg7[%78, %c0_40, %c0_41], %81 {strides = array<i32>} : memref<8x2x32xf32, #tpu.memory_space<vmem>>, vector<1x2x32xf32>,
    %c8_i32 = arith.constant 8 : i32
    %c0_42 = arith.constant 0 : index
    %c0_43 = arith.constant 0 : index
    %82 = vector.load %arg3[%c0_42, %c0_43] : memref<32x32xf32, #tpu.memory_space<vmem>>, vector<32x32xf32>
    %cst_44 = arith.constant 0.000000e+00 : f32
    %83 = vector.broadcast %cst_44 : f32 to vector<2x32xf32>
    %c0_i32_45 = arith.constant 0 : i32
    %cst_46 = arith.constant dense<0.000000e+00> : vector<2x32xf32>
    %84 = tpu.matmul %83, %82, %cst_46 {dimension_numbers = #tpu.dot_dimension_numbers<[1], [0], [0], [1], [0, 0, 1, 1], [], []>} : vector<2x32xf32>, vector<32x32xf32>, vector<2x32xf32> -> vector<2x32xf32>
    %85 = arith.index_cast %c0_i32_45 : i32 to index
    %c0_47 = arith.constant 0 : index
    %c0_48 = arith.constant 0 : index
    %86 = vector.load %arg7[%85, %c0_47, %c0_48] : memref<8x2x32xf32, #tpu.memory_space<vmem>>, vector<1x2x32xf32>
    %87 = vector.shape_cast %86 : vector<1x2x32xf32> to vector<2x32xf32>
    %88 = arith.addf %84, %87 : vector<2x32xf32>
    %89 = math.tanh %88 : vector<2x32xf32>
    %c1_i32_49 = arith.constant 1 : i32
    %cst_50 = arith.constant dense<0.000000e+00> : vector<2x32xf32>
    %90 = tpu.matmul %89, %82, %cst_50 {dimension_numbers = #tpu.dot_dimension_numbers<[1], [0], [0], [1], [0, 0, 1, 1], [], []>} : vector<2x32xf32>, vector<32x32xf32>, vector<2x32xf32> -> vector<2x32xf32>
    %91 = arith.index_cast %c1_i32_49 : i32 to index
    %c0_51 = arith.constant 0 : index
    %c0_52 = arith.constant 0 : index
    %92 = vector.load %arg7[%91, %c0_51, %c0_52] : memref<8x2x32xf32, #tpu.memory_space<vmem>>, vector<1x2x32xf32>
    %93 = vector.shape_cast %92 : vector<1x2x32xf32> to vector<2x32xf32>
    %94 = arith.addf %90, %93 : vector<2x32xf32>
    %95 = math.tanh %94 : vector<2x32xf32>
    %c2_i32_53 = arith.constant 2 : i32
    %cst_54 = arith.constant dense<0.000000e+00> : vector<2x32xf32>
    %96 = tpu.matmul %95, %82, %cst_54 {dimension_numbers = #tpu.dot_dimension_numbers<[1], [0], [0], [1], [0, 0, 1, 1], [], []>} : vector<2x32xf32>, vector<32x32xf32>, vector<2x32xf32> -> vector<2x32xf32>
    %97 = arith.index_cast %c2_i32_53 : i32 to index
    %c0_55 = arith.constant 0 : index
    %c0_56 = arith.constant 0 : index
    %98 = vector.load %arg7[%97, %c0_55, %c0_56] : memref<8x2x32xf32, #tpu.memory_space<vmem>>, vector<1x2x32xf32>
    %99 = vector.shape_cast %98 : vector<1x2x32xf32> to vector<2x32xf32>
    %100 = arith.addf %96, %99 : vector<2x32xf32>
    %101 = math.tanh %100 : vector<2x32xf32>
    %c3_i32_57 = arith.constant 3 : i32
    %cst_58 = arith.constant dense<0.000000e+00> : vector<2x32xf32>
    %102 = tpu.matmul %101, %82, %cst_58 {dimension_numbers = #tpu.dot_dimension_numbers<[1], [0], [0], [1], [0, 0, 1, 1], [], []>} : vector<2x32xf32>, vector<32x32xf32>, vector<2x32xf32> -> vector<2x32xf32>
    %103 = arith.index_cast %c3_i32_57 : i32 to index
    %c0_59 = arith.constant 0 : index
    %c0_60 = arith.constant 0 : index
    %104 = vector.load %arg7[%103, %c0_59, %c0_60] : memref<8x2x32xf32, #tpu.memory_space<vmem>>, vector<1x2x32xf32>
    %105 = vector.shape_cast %104 : vector<1x2x32xf32> to vector<2x32xf32>
    %106 = arith.addf %102, %105 : vector<2x32xf32>
    %107 = math.tanh %106 : vector<2x32xf32>
    %c4_i32_61 = arith.constant 4 : i32
    %cst_62 = arith.constant dense<0.000000e+00> : vector<2x32xf32>
    %108 = tpu.matmul %107, %82, %cst_62 {dimension_numbers = #tpu.dot_dimension_numbers<[1], [0], [0], [1], [0, 0, 1, 1], [], []>} : vector<2x32xf32>, vector<32x32xf32>, vector<2x32xf32> -> vector<2x32xf32>
    %109 = arith.index_cast %c4_i32_61 : i32 to index
    %c0_63 = arith.constant 0 : index
    %c0_64 = arith.constant 0 : index
    %110 = vector.load %arg7[%109, %c0_63, %c0_64] : memref<8x2x32xf32, #tpu.memory_space<vmem>>, vector<1x2x32xf32>
    %111 = vector.shape_cast %110 : vector<1x2x32xf32> to vector<2x32xf32>
    %112 = arith.addf %108, %111 : vector<2x32xf32>
    %113 = math.tanh %112 : vector<2x32xf32>
    %c5_i32_65 = arith.constant 5 : i32
    %cst_66 = arith.constant dense<0.000000e+00> : vector<2x32xf32>
    %114 = tpu.matmul %113, %82, %cst_66 {dimension_numbers = #tpu.dot_dimension_numbers<[1], [0], [0], [1], [0, 0, 1, 1], [], []>} : vector<2x32xf32>, vector<32x32xf32>, vector<2x32xf32> -> vector<2x32xf32>
    %115 = arith.index_cast %c5_i32_65 : i32 to index
    %c0_67 = arith.constant 0 : index
    %c0_68 = arith.constant 0 : index
    %116 = vector.load %arg7[%115, %c0_67, %c0_68] : memref<8x2x32xf32, #tpu.memory_space<vmem>>, vector<1x2x32xf32>
    %117 = vector.shape_cast %116 : vector<1x2x32xf32> to vector<2x32xf32>
    %118 = arith.addf %114, %117 : vector<2x32xf32>
    %119 = math.tanh %118 : vector<2x32xf32>
    %c6_i32_69 = arith.constant 6 : i32
    %cst_70 = arith.constant dense<0.000000e+00> : vector<2x32xf32>
    %120 = tpu.matmul %119, %82, %cst_70 {dimension_numbers = #tpu.dot_dimension_numbers<[1], [0], [0], [1], [0, 0, 1, 1], [], []>} : vector<2x32xf32>, vector<32x32xf32>, vector<2x32xf32> -> vector<2x32xf32>
    %121 = arith.index_cast %c6_i32_69 : i32 to index
    %c0_71 = arith.constant 0 : index
    %c0_72 = arith.constant 0 : index
    %122 = vector.load %arg7[%121, %c0_71, %c0_72] : memref<8x2x32xf32, #tpu.memory_space<vmem>>, vector<1x2x32xf32>
    %123 = vector.shape_cast %122 : vector<1x2x32xf32> to vector<2x32xf32>
    %124 = arith.addf %120, %123 : vector<2x32xf32>
    %125 = math.tanh %124 : vector<2x32xf32>
    %c7_i32_73 = arith.constant 7 : i32
    %cst_74 = arith.constant dense<0.000000e+00> : vector<2x32xf32>
    %126 = tpu.matmul %125, %82, %cst_74 {dimension_numbers = #tpu.dot_dimension_numbers<[1], [0], [0], [1], [0, 0, 1, 1], [], []>} : vector<2x32xf32>, vector<32x32xf32>, vector<2x32xf32> -> vector<2x32xf32>
    %127 = arith.index_cast %c7_i32_73 : i32 to index
    %c0_75 = arith.constant 0 : index
    %c0_76 = arith.constant 0 : index
    %128 = vector.load %arg7[%127, %c0_75, %c0_76] : memref<8x2x32xf32, #tpu.memory_space<vmem>>, vector<1x2x32xf32>
    %129 = vector.shape_cast %128 : vector<1x2x32xf32> to vector<2x32xf32>
    %130 = arith.addf %126, %129 : vector<2x32xf32>
    %131 = math.tanh %130 : vector<2x32xf32>
    %c8_i32_77 = arith.constant 8 : i32
    %c0_78 = arith.constant 0 : index
    %c0_79 = arith.constant 0 : index
    %c0_80 = arith.constant 0 : index
    %132 = vector.load %arg5[%c0_78, %c0_79, %c0_80] : memref<2x8x32xf32, #tpu.memory_space<vmem>>, vector<2x8x32xf32>
    %133 = vector.shape_cast %131 : vector<2x32xf32> to vector<2x1x32xf32>
    %134 = vector.broadcast %133 : vector<2x1x32xf32> to vector<2x8x32xf32>
    %135 = arith.mulf %134, %132 : vector<2x8x32xf32>
    %cst_81 = arith.constant dense<0.000000e+00> : vector<2x8xf32>
    %136 = vector.multi_reduction <add>, %135, %cst_81 [2] : vector<2x8x32xf32> to vector<2x8xf32>
    %cst_82 = arith.constant dense<0xFF800000> : vector<2xf32>
    %137 = vector.multi_reduction <maximumf>, %136, %cst_82 [1] : vector<2x8xf32> to vector<2xf32>
    %138 = vector.shape_cast %137 : vector<2xf32> to vector<2x1xf32>
    %139 = vector.broadcast %138 : vector<2x1xf32> to vector<2x8xf32>
    %140 = arith.subf %136, %139 : vector<2x8xf32>
    %141 = math.exp %140 : vector<2x8xf32>
    %cst_83 = arith.constant dense<0.000000e+00> : vector<2xf32>
    %142 = vector.multi_reduction <add>, %141, %cst_83 [1] : vector<2x8xf32> to vector<2xf32>
    %143 = vector.shape_cast %142 : vector<2xf32> to vector<2x1xf32>
    %144 = vector.broadcast %143 : vector<2x1xf32> to vector<2x8xf32>
    %145 = arith.divf %141, %144 : vector<2x8xf32>
    %c0_84 = arith.constant 0 : index
    %c0_85 = arith.constant 0 : index
    %146 = vector.load %arg6[%c0_84, %c0_85] : memref<2x8xf32, #tpu.memory_space<vmem>>, vector<2x8xf32>
    tpu.vector_store %arg6[%c0_84, %c0_85], %145 {strides = array<i32>} : memref<2x8xf32, #tpu.memory_space<vmem>>, vector<2x8xf32>,
    return
  }
  func.func @transform_0(%arg0: i32) -> (i32, i32, i32) {
    %c0_i32 = arith.constant 0 : i32
    %c0_i32_0 = arith.constant 0 : i32
    %c0_i32_1 = arith.constant 0 : i32
    return %c0_i32, %arg0, %c0_i32_0 : i32, i32, i32
  }
  func.func @transform_1(%arg0: i32) -> (i32, i32) {
    %c0_i32 = arith.constant 0 : i32
    %c0_i32_0 = arith.constant 0 : i32
    %c0_i32_1 = arith.constant 0 : i32
    return %c0_i32, %c0_i32_0 : i32, i32
  }
  func.func @transform_2(%arg0: i32) -> (i32, i32) {
    %c0_i32 = arith.constant 0 : i32
    %c0_i32_0 = arith.constant 0 : i32
    %c0_i32_1 = arith.constant 0 : i32
    return %c0_i32, %c0_i32_0 : i32, i32
  }
  func.func @transform_3(%arg0: i32) -> (i32, i32) {
    %c0_i32 = arith.constant 0 : i32
    %c0_i32_0 = arith.constant 0 : i32
    %c0_i32_1 = arith.constant 0 : i32
    return %c0_i32, %c0_i32_0 : i32, i32
  }
  func.func @transform_4(%arg0: i32) -> (i32, i32, i32) {
    %c0_i32 = arith.constant 0 : i32
    %c0_i32_0 = arith.constant 0 : i32
    %c0_i32_1 = arith.constant 0 : i32
    return %arg0, %c0_i32, %c0_i32_0 : i32, i32, i32
  }
  func.func @transform_5(%arg0: i32) -> (i32, i32) {
    %c0_i32 = arith.constant 0 : i32
    %c0_i32_0 = arith.constant 0 : i32
    return %arg0, %c0_i32 : i32, i32
  }
}

</mosaic_0001>

<llo_original>
// kernel: tpu_custom_call.1
$region0: #{tpu_custom_call.1}
  #allocation0 [shape = 'u32[]', space=smem, size = 0x4, offset = 0x4, fixed_abs, tag = 'smem constant byte address 0x4 - core index']
  #allocation1 [shape = 'u32[144,128]{1,0:T(1,128)}', space=vmem, size = 0x12000, scoped, tag = 'internal scratch']
  #allocation2 [shape = 'f32[8,2,32]{2,1,0:T(2,128)}', space=vmem, size = 0x2000, scoped, tag = 'scratch operand']
  %s0 = inlined_call_operand.hbm [shape: f32[8,2,16], index: 0, kind: input, shape index: {}]
  %s1 = inlined_call_operand.hbm [shape: f32[16,32], index: 1, kind: input, shape index: {}]
  %s2 = inlined_call_operand.hbm [shape: f32[32,32], index: 2, kind: input, shape index: {}]
  %s3 = inlined_call_operand.vmem [shape: f32[1,32], index: 3, kind: input, shape index: {}]
  %s4 = inlined_call_operand.hbm [shape: f32[2,8,32], index: 4, kind: input, shape index: {}]
  %s5 = inlined_call_operand.hbm [shape: f32[2,8], index: 5, kind: output, shape index: {}]
  %s6 = sld [smem:[#allocation0]]
  $region46: #{tpu_custom_call.1} parent=0
    _
  %s8 = ssub.s32 1, %s6
  %s9 = scalar_select 0, %s8, %s6
  $region1: #{tpu_custom_call.1} parent=0
    #allocation3 [shape = 'u8[8192]{0}', space=vmem, size = 0x2000, scoped, tag = 'input window, operand 0, single buffered']
    #allocation4 [shape = 's32[1]{0}', space=sflag, size = 0x4, scoped, tag = 'scoped memory for tpu_custom_call.1']
    #allocation5 [shape = 's32[1]{0}', space=sflag, size = 0x4, scoped, tag = 'scoped memory for tpu_custom_call.1']
    #allocation6 [shape = 'u8[8192]{0}', space=vmem, size = 0x2000, scoped, tag = 'input window, operand 1, single buffered']
    #allocation7 [shape = 's32[1]{0}', space=sflag, size = 0x4, scoped, tag = 'scoped memory for tpu_custom_call.1']
    #allocation8 [shape = 'u8[16384]{0}', space=vmem, size = 0x4000, scoped, tag = 'input window, operand 2, single buffered']
    #allocation9 [shape = 'u8[8192]{0}', space=vmem, size = 0x2000, scoped, tag = 'input window, operand 4, single buffered']
    #allocation10 [shape = 's32[1]{0}', space=sflag, size = 0x4, scoped, tag = 'scoped memory for tpu_custom_call.1']
    #allocation11 [shape = 'u8[1024]{0}', space=vmem, size = 0x400, scoped, tag = 'output window, operand 0, single buffered']
    %10 = vsyncpa [#allocation4], 0
    %11 = vsyncpa [#allocation7], 0
    %12 = vsyncpa [#allocation10], 0
    %13 = vsyncpa [#allocation5], 0
    // Predicated region
    $region2: #{tpu_custom_call.1} parent=1 // pred_check
      _
    $region3: #{tpu_custom_call.1} parent=1 // pred_check_branch
      %15 = sbr.rel (0) target = $region5
    $region4: #{tpu_custom_call.1} parent=1 // pred_region
      %s17 = ssub.s32 256, 256
      %18 = vsyncadd [#allocation4], %s17
      %s19 = sshll.u32 [#allocation3], 4
      %s20 = int_to_ptr.vmem [resolvable:$true] %s19
      %25 = dma.hbm_to_vmem [thread:$0]  %s0, 256, %s20, [#allocation4], 32, 32, 2
    $region5: #{tpu_custom_call.1} parent=1 // pred_fallthru
      _
    // Predicated region
    $region6: #{tpu_custom_call.1} parent=1 // pred_check
      _
    $region7: #{tpu_custom_call.1} parent=1 // pred_check_branch
      %27 = sbr.rel (0) target = $region9
    $region8: #{tpu_custom_call.1} parent=1 // pred_region
      %s29 = ssub.s32 256, 256
      %30 = vsyncadd [#allocation7], %s29
      %s31 = sshll.u32 [#allocation6], 4
      %s32 = int_to_ptr.vmem [resolvable:$true] %s31
      %37 = dma.hbm_to_vmem [thread:$0]  %s1, 256, %s32, [#allocation7], 128, 128, 8
    $region9: #{tpu_custom_call.1} parent=1 // pred_fallthru
      _
    // Predicated region
    $region10: #{tpu_custom_call.1} parent=1 // pred_check
      _
    $region11: #{tpu_custom_call.1} parent=1 // pred_check_branch
      %39 = sbr.rel (0) target = $region13
    $region12: #{tpu_custom_call.1} parent=1 // pred_region
      %s41 = ssub.s32 512, 512
      %42 = vsyncadd [#allocation7], %s41
      %s43 = sshll.u32 [#allocation8], 4
      %s44 = int_to_ptr.vmem [resolvable:$true] %s43
      %49 = dma.hbm_to_vmem [thread:$0]  %s2, 512, %s44, [#allocation7], 128, 128, 8
    $region13: #{tpu_custom_call.1} parent=1 // pred_fallthru
      _
    // Predicated region
    $region14: #{tpu_custom_call.1} parent=1 // pred_check
      _
    $region15: #{tpu_custom_call.1} parent=1 // pred_check_branch
      %51 = sbr.rel (0) target = $region17
    $region16: #{tpu_custom_call.1} parent=1 // pred_region
      _
    $region17: #{tpu_custom_call.1} parent=1 // pred_fallthru
      _
    // Predicated region
    $region18: #{tpu_custom_call.1} parent=1 // pred_check
      _
    $region19: #{tpu_custom_call.1} parent=1 // pred_check_branch
      %53 = sbr.rel (0) target = $region21
    $region20: #{tpu_custom_call.1} parent=1 // pred_region
      %s55 = ssub.s32 256, 256
      %56 = vsyncadd [#allocation10], %s55
      %s57 = sshll.u32 [#allocation9], 4
      %s58 = int_to_ptr.vmem [resolvable:$true] %s57
      %63 = dma.hbm_to_vmem [thread:$0]  %s4, 256, %s58, [#allocation10], 128, 128, 8
    $region21: #{tpu_custom_call.1} parent=1 // pred_fallthru
      _
    // Predicated region
    $region22: #{tpu_custom_call.1} parent=1 // pred_check
      _
    $region23: #{tpu_custom_call.1} parent=1 // pred_check_branch
      %65 = sbr.rel (0) target = $region25
    $region24: #{tpu_custom_call.1} parent=1 // pred_region
      %66 = dma.done [#allocation4], 256
    $region25: #{tpu_custom_call.1} parent=1 // pred_fallthru
      _
    // Predicated region
    $region26: #{tpu_custom_call.1} parent=1 // pred_check
      _
    $region27: #{tpu_custom_call.1} parent=1 // pred_check_branch
      %68 = sbr.rel (0) target = $region29
    $region28: #{tpu_custom_call.1} parent=1 // pred_region
      %69 = dma.done [#allocation7], 256
    $region29: #{tpu_custom_call.1} parent=1 // pred_fallthru
      _
    // Predicated region
    $region30: #{tpu_custom_call.1} parent=1 // pred_check
      _
    $region31: #{tpu_custom_call.1} parent=1 // pred_check_branch
      %71 = sbr.rel (0) target = $region33
    $region32: #{tpu_custom_call.1} parent=1 // pred_region
      %72 = dma.done [#allocation7], 512
    $region33: #{tpu_custom_call.1} parent=1 // pred_fallthru
      _
    // Predicated region
    $region34: #{tpu_custom_call.1} parent=1 // pred_check
      _
    $region35: #{tpu_custom_call.1} parent=1 // pred_check_branch
      %74 = sbr.rel (0) target = $region37
    $region36: #{tpu_custom_call.1} parent=1 // pred_region
      %75 = dma.done [#allocation10], 256
    $region37: #{tpu_custom_call.1} parent=1 // pred_fallthru
      _
    %v76 = vld [vmem:[#allocation6] sm:$0xff]
    %v77 = vld [vmem:[#allocation6 + $0x8] sm:$0xff]
    %v78 = vld [vmem:[%s3] sm:$0x1]
    %v79 = vld [vmem:[#allocation3] sm:$0x3]
    %v81 = vlaneseq
    %v82 = vshrl.u32 %v81, 7
    %v83 = vsub.s32 0, %v82
    %v84 = vrot.slane %v78, %v83
    %vm86 = vcmask 130048
    %v88 = vsel %vm86, %v79, 0
    %90 = vmatprep.subr.mxu0 0.0
    %91 = vmatpush1.msra.mxu0 0.0
    %92 = vmatprep.subr.mxu0 0.0
    %93 = vmatpush1.msra.mxu0 0.0
    %94 = vmatprep.subr.mxu0 0.0
    %95 = vmatpush1.msra.mxu0 0.0
    %96 = vmatprep.subr.mxu0 0.0
    %97 = vmatpush1.msra.mxu0 0.0
    %98 = vmatprep.subr.mxu0 0.0
    %99 = vmatpush1.msra.mxu0 0.0
    %100 = vmatprep.subr.mxu0 0.0
    %101 = vmatpush1.msra.mxu0 0.0
    %102 = vmatprep.subr.mxu0 0.0
    %103 = vmatpush1.msra.mxu0 0.0
    %104 = vmatprep.subr.mxu0 0.0
    %105 = vmatpush1.msra.mxu0 0.0
    %106 = vmatprep.subr.mxu0 0.0
    %107 = vmatpush1.msra.mxu0 0.0
    %108 = vmatprep.subr.mxu0 0.0
    %109 = vmatpush1.msra.mxu0 0.0
    %110 = vmatprep.subr.mxu0 0.0
    %111 = vmatpush1.msra.mxu0 0.0
    %112 = vmatprep.subr.mxu0 0.0
    %113 = vmatpush1.msra.mxu0 0.0
    %114 = vmatprep.subr.mxu0 0.0
    %115 = vmatpush1.msra.mxu0 0.0
    %116 = vmatprep.subr.mxu0 0.0
    %117 = vmatpush1.msra.mxu0 0.0
    %118 = vmatprep.subr.mxu0 0.0
    %119 = vmatpush1.msra.mxu0 %v77
    %120 = vmatprep.subr.mxu0 0.0
    %121 = vmatpush1.msra.mxu0 %v76
    %122 = vmatprep.subr.mxu0 0.0
    %123 = vmatpush2.msra.mxu0 0.0
    %124 = vmatprep.subr.mxu0 0.0
    %125 = vmatpush2.msra.mxu0 0.0
    %126 = vmatprep.subr.mxu0 0.0
    %127 = vmatpush2.msra.mxu0 0.0
    %128 = vmatprep.subr.mxu0 0.0
    %129 = vmatpush2.msra.mxu0 0.0
    %130 = vmatprep.subr.mxu0 0.0
    %131 = vmatpush2.msra.mxu0 0.0
    %132 = vmatprep.subr.mxu0 0.0
    %133 = vmatpush2.msra.mxu0 0.0
    %134 = vmatprep.subr.mxu0 0.0
    %135 = vmatpush2.msra.mxu0 0.0
    %136 = vmatprep.subr.mxu0 0.0
    %137 = vmatpush2.msra.mxu0 0.0
    %138 = vmatprep.subr.mxu0 0.0
    %139 = vmatpush2.msra.mxu0 0.0
    %140 = vmatprep.subr.mxu0 0.0
    %141 = vmatpush2.msra.mxu0 0.0
    %142 = vmatprep.subr.mxu0 0.0
    %143 = vmatpush2.msra.mxu0 0.0
    %144 = vmatprep.subr.mxu0 0.0
    %145 = vmatpush2.msra.mxu0 0.0
    %146 = vmatprep.subr.mxu0 0.0
    %147 = vmatpush2.msra.mxu0 0.0
    %148 = vmatprep.subr.mxu0 0.0
    %149 = vmatpush2.msra.mxu0 0.0
    %150 = vmatprep.subr.mxu0 0.0
    %151 = vmatpush2.msra.mxu0 0.0
    %152 = vmatprep.subr.mxu0 0.0
    %153 = vmatpush2.msra.mxu0 0.0
    %154 = vmatprep.mubr.f32.mxu0 0.0
    %155 = vmatmul.mubr.f32.gmra.mxu0 %v88
    %v156 = vpop.f32.mrf.mxu0
    %v157 = vadd.f32 %v84, %v156
    %v158 = vpop.f32.mrf.mxu0
    %159 = vdwg.mxu0
    %vm160 = vcmask 254976
    %161 = vst.msk [vmem:[#allocation2] sm:$0x3] %vm160, %v157
    %s162 = scalar_lea.vmem [#allocation3], 2
    %v163 = vld [vmem:[%s162] sm:$0x3]
    %v165 = vsel %vm86, %v163, 0
    %167 = vmatprep.subr.mxu0 0.0
    %168 = vmatpush1.msra.mxu0 0.0
    %169 = vmatprep.subr.mxu0 0.0
    %170 = vmatpush1.msra.mxu0 0.0
    %171 = vmatprep.subr.mxu0 0.0
    %172 = vmatpush1.msra.mxu0 0.0
    %173 = vmatprep.subr.mxu0 0.0
    %174 = vmatpush1.msra.mxu0 0.0
    %175 = vmatprep.subr.mxu0 0.0
    %176 = vmatpush1.msra.mxu0 0.0
    %177 = vmatprep.subr.mxu0 0.0
    %178 = vmatpush1.msra.mxu0 0.0
    %179 = vmatprep.subr.mxu0 0.0
    %180 = vmatpush1.msra.mxu0 0.0
    %181 = vmatprep.subr.mxu0 0.0
    %182 = vmatpush1.msra.mxu0 0.0
    %183 = vmatprep.subr.mxu0 0.0
    %184 = vmatpush1.msra.mxu0 0.0
    %185 = vmatprep.subr.mxu0 0.0
    %186 = vmatpush1.msra.mxu0 0.0
    %187 = vmatprep.subr.mxu0 0.0
    %188 = vmatpush1.msra.mxu0 0.0
    %189 = vmatprep.subr.mxu0 0.0
    %190 = vmatpush1.msra.mxu0 0.0
    %191 = vmatprep.subr.mxu0 0.0
    %192 = vmatpush1.msra.mxu0 0.0
    %193 = vmatprep.subr.mxu0 0.0
    %194 = vmatpush1.msra.mxu0 0.0
    %195 = vmatprep.subr.mxu0 0.0
    %196 = vmatpush1.msra.mxu0 %v77
    %197 = vmatprep.subr.mxu0 0.0
    %198 = vmatpush1.msra.mxu0 %v76
    %199 = vmatprep.subr.mxu0 0.0
    %200 = vmatpush2.msra.mxu0 0.0
    %201 = vmatprep.subr.mxu0 0.0
    %202 = vmatpush2.msra.mxu0 0.0
    %203 = vmatprep.subr.mxu0 0.0
    %204 = vmatpush2.msra.mxu0 0.0
    %205 = vmatprep.subr.mxu0 0.0
    %206 = vmatpush2.msra.mxu0 0.0
    %207 = vmatprep.subr.mxu0 0.0
    %208 = vmatpush2.msra.mxu0 0.0
    %209 = vmatprep.subr.mxu0 0.0
    %210 = vmatpush2.msra.mxu0 0.0
    %211 = vmatprep.subr.mxu0 0.0
    %212 = vmatpush2.msra.mxu0 0.0
    %213 = vmatprep.subr.mxu0 0.0
    %214 = vmatpush2.msra.mxu0 0.0
    %215 = vmatprep.subr.mxu0 0.0
    %216 = vmatpush2.msra.mxu0 0.0
    %217 = vmatprep.subr.mxu0 0.0
    %218 = vmatpush2.msra.mxu0 0.0
    %219 = vmatprep.subr.mxu0 0.0
    %220 = vmatpush2.msra.mxu0 0.0
    %221 = vmatprep.subr.mxu0 0.0
    %222 = vmatpush2.msra.mxu0 0.0
    %223 = vmatprep.subr.mxu0 0.0
    %224 = vmatpush2.msra.mxu0 0.0
    %225 = vmatprep.subr.mxu0 0.0
    %226 = vmatpush2.msra.mxu0 0.0
    %227 = vmatprep.subr.mxu0 0.0
    %228 = vmatpush2.msra.mxu0 0.0
    %229 = vmatprep.subr.mxu0 0.0
    %230 = vmatpush2.msra.mxu0 0.0
    %231 = vmatprep.mubr.f32.mxu0 0.0
    %232 = vmatmul.mubr.f32.gmra.mxu0 %v165
    %v233 = vpop.f32.mrf.mxu0
    %v234 = vadd.f32 %v84, %v233
    %v235 = vpop.f32.mrf.mxu0
    %236 = vdwg.mxu0
    %s237 = scalar_lea.vmem [#allocation2], 2
    %238 = vst.msk [vmem:[%s237] sm:$0x3] %vm160, %v234
    %s239 = scalar_lea.vmem [#allocation3], 4
    %v240 = vld [vmem:[%s239] sm:$0x3]
    %v242 = vsel %vm86, %v240, 0
    %244 = vmatprep.subr.mxu0 0.0
    %245 = vmatpush1.msra.mxu0 0.0
    %246 = vmatprep.subr.mxu0 0.0
    %247 = vmatpush1.msra.mxu0 0.0
    %248 = vmatprep.subr.mxu0 0.0
    %249 = vmatpush1.msra.mxu0 0.0
    %250 = vmatprep.subr.mxu0 0.0
    %251 = vmatpush1.msra.mxu0 0.0
    %252 = vmatprep.subr.mxu0 0.0
    %253 = vmatpush1.msra.mxu0 0.0
    %254 = vmatprep.subr.mxu0 0.0
    %255 = vmatpush1.msra.mxu0 0.0
    %256 = vmatprep.subr.mxu0 0.0
    %257 = vmatpush1.msra.mxu0 0.0
    %258 = vmatprep.subr.mxu0 0.0
    %259 = vmatpush1.msra.mxu0 0.0
    %260 = vmatprep.subr.mxu0 0.0
    %261 = vmatpush1.msra.mxu0 0.0
    %262 = vmatprep.subr.mxu0 0.0
    %263 = vmatpush1.msra.mxu0 0.0
    %264 = vmatprep.subr.mxu0 0.0
    %265 = vmatpush1.msra.mxu0 0.0
    %266 = vmatprep.subr.mxu0 0.0
    %267 = vmatpush1.msra.mxu0 0.0
    %268 = vmatprep.subr.mxu0 0.0
    %269 = vmatpush1.msra.mxu0 0.0
    %270 = vmatprep.subr.mxu0 0.0
    %271 = vmatpush1.msra.mxu0 0.0
    %272 = vmatprep.subr.mxu0 0.0
    %273 = vmatpush1.msra.mxu0 %v77
    %274 = vmatprep.subr.mxu0 0.0
    %275 = vmatpush1.msra.mxu0 %v76
    %276 = vmatprep.subr.mxu0 0.0
    %277 = vmatpush2.msra.mxu0 0.0
    %278 = vmatprep.subr.mxu0 0.0
    %279 = vmatpush2.msra.mxu0 0.0
    %280 = vmatprep.subr.mxu0 0.0
    %281 = vmatpush2.msra.mxu0 0.0
    %282 = vmatprep.subr.mxu0 0.0
    %283 = vmatpush2.msra.mxu0 0.0
    %284 = vmatprep.subr.mxu0 0.0
    %285 = vmatpush2.msra.mxu0 0.0
    %286 = vmatprep.subr.mxu0 0.0
    %287 = vmatpush2.msra.mxu0 0.0
    %288 = vmatprep.subr.mxu0 0.0
    %289 = vmatpush2.msra.mxu0 0.0
    %290 = vmatprep.subr.mxu0 0.0
    %291 = vmatpush2.msra.mxu0 0.0
    %292 = vmatprep.subr.mxu0 0.0
    %293 = vmatpush2.msra.mxu0 0.0
    %294 = vmatprep.subr.mxu0 0.0
    %295 = vmatpush2.msra.mxu0 0.0
    %296 = vmatprep.subr.mxu0 0.0
    %297 = vmatpush2.msra.mxu0 0.0
    %298 = vmatprep.subr.mxu0 0.0
    %299 = vmatpush2.msra.mxu0 0.0
    %300 = vmatprep.subr.mxu0 0.0
    %301 = vmatpush2.msra.mxu0 0.0
    %302 = vmatprep.subr.mxu0 0.0
    %303 = vmatpush2.msra.mxu0 0.0
    %304 = vmatprep.subr.mxu0 0.0
    %305 = vmatpush2.msra.mxu0 0.0
    %306 = vmatprep.subr.mxu0 0.0
    %307 = vmatpush2.msra.mxu0 0.0
    %308 = vmatprep.mubr.f32.mxu0 0.0
    %309 = vmatmul.mubr.f32.gmra.mxu0 %v242
    %v310 = vpop.f32.mrf.mxu0
    %v311 = vadd.f32 %v84, %v310
    %v312 = vpop.f32.mrf.mxu0
    %313 = vdwg.mxu0
    %s314 = scalar_lea.vmem [#allocation2], 4
    %315 = vst.msk [vmem:[%s314] sm:$0x3] %vm160, %v311
    %s316 = scalar_lea.vmem [#allocation3], 6
    %v317 = vld [vmem:[%s316] sm:$0x3]
    %v319 = vsel %vm86, %v317, 0
    %321 = vmatprep.subr.mxu0 0.0
    %322 = vmatpush1.msra.mxu0 0.0
    %323 = vmatprep.subr.mxu0 0.0
    %324 = vmatpush1.msra.mxu0 0.0
    %325 = vmatprep.subr.mxu0 0.0
    %326 = vmatpush1.msra.mxu0 0.0
    %327 = vmatprep.subr.mxu0 0.0
    %328 = vmatpush1.msra.mxu0 0.0
    %329 = vmatprep.subr.mxu0 0.0
    %330 = vmatpush1.msra.mxu0 0.0
    %331 = vmatprep.subr.mxu0 0.0
    %332 = vmatpush1.msra.mxu0 0.0
    %333 = vmatprep.subr.mxu0 0.0
    %334 = vmatpush1.msra.mxu0 0.0
    %335 = vmatprep.subr.mxu0 0.0
    %336 = vmatpush1.msra.mxu0 0.0
    %337 = vmatprep.subr.mxu0 0.0
    %338 = vmatpush1.msra.mxu0 0.0
    %339 = vmatprep.subr.mxu0 0.0
    %340 = vmatpush1.msra.mxu0 0.0
    %341 = vmatprep.subr.mxu0 0.0
    %342 = vmatpush1.msra.mxu0 0.0
    %343 = vmatprep.subr.mxu0 0.0
    %344 = vmatpush1.msra.mxu0 0.0
    %345 = vmatprep.subr.mxu0 0.0
    %346 = vmatpush1.msra.mxu0 0.0
    %347 = vmatprep.subr.mxu0 0.0
    %348 = vmatpush1.msra.mxu0 0.0
    %349 = vmatprep.subr.mxu0 0.0
    %350 = vmatpush1.msra.mxu0 %v77
    %351 = vmatprep.subr.mxu0 0.0
    %352 = vmatpush1.msra.mxu0 %v76
    %353 = vmatprep.subr.mxu0 0.0
    %354 = vmatpush2.msra.mxu0 0.0
    %355 = vmatprep.subr.mxu0 0.0
    %356 = vmatpush2.msra.mxu0 0.0
    %357 = vmatprep.subr.mxu0 0.0
    %358 = vmatpush2.msra.mxu0 0.0
    %359 = vmatprep.subr.mxu0 0.0
    %360 = vmatpush2.msra.mxu0 0.0
    %361 = vmatprep.subr.mxu0 0.0
    %362 = vmatpush2.msra.mxu0 0.0
    %363 = vmatprep.subr.mxu0 0.0
    %364 = vmatpush2.msra.mxu0 0.0
    %365 = vmatprep.subr.mxu0 0.0
    %366 = vmatpush2.msra.mxu0 0.0
    %367 = vmatprep.subr.mxu0 0.0
    %368 = vmatpush2.msra.mxu0 0.0
    %369 = vmatprep.subr.mxu0 0.0
    %370 = vmatpush2.msra.mxu0 0.0
    %371 = vmatprep.subr.mxu0 0.0
    %372 = vmatpush2.msra.mxu0 0.0
    %373 = vmatprep.subr.mxu0 0.0
    %374 = vmatpush2.msra.mxu0 0.0
    %375 = vmatprep.subr.mxu0 0.0
    %376 = vmatpush2.msra.mxu0 0.0
    %377 = vmatprep.subr.mxu0 0.0
    %378 = vmatpush2.msra.mxu0 0.0
    %379 = vmatprep.subr.mxu0 0.0
    %380 = vmatpush2.msra.mxu0 0.0
    %381 = vmatprep.subr.mxu0 0.0
    %382 = vmatpush2.msra.mxu0 0.0
    %383 = vmatprep.subr.mxu0 0.0
    %384 = vmatpush2.msra.mxu0 0.0
    %385 = vmatprep.mubr.f32.mxu0 0.0
    %386 = vmatmul.mubr.f32.gmra.mxu0 %v319
    %v387 = vpop.f32.mrf.mxu0
    %v388 = vadd.f32 %v84, %v387
    %v389 = vpop.f32.mrf.mxu0
    %390 = vdwg.mxu0
    %s391 = scalar_lea.vmem [#allocation2], 6
    %392 = vst.msk [vmem:[%s391] sm:$0x3] %vm160, %v388
    %s393 = scalar_lea.vmem [#allocation3], 8
    %v394 = vld [vmem:[%s393] sm:$0x3]
    %v396 = vsel %vm86, %v394, 0
    %398 = vmatprep.subr.mxu0 0.0
    %399 = vmatpush1.msra.mxu0 0.0
    %400 = vmatprep.subr.mxu0 0.0
    %401 = vmatpush1.msra.mxu0 0.0
    %402 = vmatprep.subr.mxu0 0.0
    %403 = vmatpush1.msra.mxu0 0.0
    %404 = vmatprep.subr.mxu0 0.0
    %405 = vmatpush1.msra.mxu0 0.0
    %406 = vmatprep.subr.mxu0 0.0
    %407 = vmatpush1.msra.mxu0 0.0
    %408 = vmatprep.subr.mxu0 0.0
    %409 = vmatpush1.msra.mxu0 0.0
    %410 = vmatprep.subr.mxu0 0.0
    %411 = vmatpush1.msra.mxu0 0.0
    %412 = vmatprep.subr.mxu0 0.0
    %413 = vmatpush1.msra.mxu0 0.0
    %414 = vmatprep.subr.mxu0 0.0
    %415 = vmatpush1.msra.mxu0 0.0
    %416 = vmatprep.subr.mxu0 0.0
    %417 = vmatpush1.msra.mxu0 0.0
    %418 = vmatprep.subr.mxu0 0.0
    %419 = vmatpush1.msra.mxu0 0.0
    %420 = vmatprep.subr.mxu0 0.0
    %421 = vmatpush1.msra.mxu0 0.0
    %422 = vmatprep.subr.mxu0 0.0
    %423 = vmatpush1.msra.mxu0 0.0
    %424 = vmatprep.subr.mxu0 0.0
    %425 = vmatpush1.msra.mxu0 0.0
    %426 = vmatprep.subr.mxu0 0.0
    %427 = vmatpush1.msra.mxu0 %v77
    %428 = vmatprep.subr.mxu0 0.0
    %429 = vmatpush1.msra.mxu0 %v76
    %430 = vmatprep.subr.mxu0 0.0
    %431 = vmatpush2.msra.mxu0 0.0
    %432 = vmatprep.subr.mxu0 0.0
    %433 = vmatpush2.msra.mxu0 0.0
    %434 = vmatprep.subr.mxu0 0.0
    %435 = vmatpush2.msra.mxu0 0.0
    %436 = vmatprep.subr.mxu0 0.0
    %437 = vmatpush2.msra.mxu0 0.0
    %438 = vmatprep.subr.mxu0 0.0
    %439 = vmatpush2.msra.mxu0 0.0
    %440 = vmatprep.subr.mxu0 0.0
    %441 = vmatpush2.msra.mxu0 0.0
    %442 = vmatprep.subr.mxu0 0.0
    %443 = vmatpush2.msra.mxu0 0.0
    %444 = vmatprep.subr.mxu0 0.0
    %445 = vmatpush2.msra.mxu0 0.0
    %446 = vmatprep.subr.mxu0 0.0
    %447 = vmatpush2.msra.mxu0 0.0
    %448 = vmatprep.subr.mxu0 0.0
    %449 = vmatpush2.msra.mxu0 0.0
    %450 = vmatprep.subr.mxu0 0.0
    %451 = vmatpush2.msra.mxu0 0.0
    %452 = vmatprep.subr.mxu0 0.0
    %453 = vmatpush2.msra.mxu0 0.0
    %454 = vmatprep.subr.mxu0 0.0
    %455 = vmatpush2.msra.mxu0 0.0
    %456 = vmatprep.subr.mxu0 0.0
    %457 = vmatpush2.msra.mxu0 0.0
    %458 = vmatprep.subr.mxu0 0.0
    %459 = vmatpush2.msra.mxu0 0.0
    %460 = vmatprep.subr.mxu0 0.0
    %461 = vmatpush2.msra.mxu0 0.0
    %462 = vmatprep.mubr.f32.mxu0 0.0
    %463 = vmatmul.mubr.f32.gmra.mxu0 %v396
    %v464 = vpop.f32.mrf.mxu0
    %v465 = vadd.f32 %v84, %v464
    %v466 = vpop.f32.mrf.mxu0
    %467 = vdwg.mxu0
    %s468 = scalar_lea.vmem [#allocation2], 8
    %469 = vst.msk [vmem:[%s468] sm:$0x3] %vm160, %v465
    %s470 = scalar_lea.vmem [#allocation3], 10
    %v471 = vld [vmem:[%s470] sm:$0x3]
    %v473 = vsel %vm86, %v471, 0
    %475 = vmatprep.subr.mxu0 0.0
    %476 = vmatpush1.msra.mxu0 0.0
    %477 = vmatprep.subr.mxu0 0.0
    %478 = vmatpush1.msra.mxu0 0.0
    %479 = vmatprep.subr.mxu0 0.0
    %480 = vmatpush1.msra.mxu0 0.0
    %481 = vmatprep.subr.mxu0 0.0
    %482 = vmatpush1.msra.mxu0 0.0
    %483 = vmatprep.subr.mxu0 0.0
    %484 = vmatpush1.msra.mxu0 0.0
    %485 = vmatprep.subr.mxu0 0.0
    %486 = vmatpush1.msra.mxu0 0.0
    %487 = vmatprep.subr.mxu0 0.0
    %488 = vmatpush1.msra.mxu0 0.0
    %489 = vmatprep.subr.mxu0 0.0
    %490 = vmatpush1.msra.mxu0 0.0
    %491 = vmatprep.subr.mxu0 0.0
    %492 = vmatpush1.msra.mxu0 0.0
    %493 = vmatprep.subr.mxu0 0.0
    %494 = vmatpush1.msra.mxu0 0.0
    %495 = vmatprep.subr.mxu0 0.0
    %496 = vmatpush1.msra.mxu0 0.0
    %497 = vmatprep.subr.mxu0 0.0
    %498 = vmatpush1.msra.mxu0 0.0
    %499 = vmatprep.subr.mxu0 0.0
    %500 = vmatpush1.msra.mxu0 0.0
    %501 = vmatprep.subr.mxu0 0.0
    %502 = vmatpush1.msra.mxu0 0.0
    %503 = vmatprep.subr.mxu0 0.0
    %504 = vmatpush1.msra.mxu0 %v77
    %505 = vmatprep.subr.mxu0 0.0
    %506 = vmatpush1.msra.mxu0 %v76
    %507 = vmatprep.subr.mxu0 0.0
    %508 = vmatpush2.msra.mxu0 0.0
    %509 = vmatprep.subr.mxu0 0.0
    %510 = vmatpush2.msra.mxu0 0.0
    %511 = vmatprep.subr.mxu0 0.0
    %512 = vmatpush2.msra.mxu0 0.0
    %513 = vmatprep.subr.mxu0 0.0
    %514 = vmatpush2.msra.mxu0 0.0
    %515 = vmatprep.subr.mxu0 0.0
    %516 = vmatpush2.msra.mxu0 0.0
    %517 = vmatprep.subr.mxu0 0.0
    %518 = vmatpush2.msra.mxu0 0.0
    %519 = vmatprep.subr.mxu0 0.0
    %520 = vmatpush2.msra.mxu0 0.0
    %521 = vmatprep.subr.mxu0 0.0
    %522 = vmatpush2.msra.mxu0 0.0
    %523 = vmatprep.subr.mxu0 0.0
    %524 = vmatpush2.msra.mxu0 0.0
    %525 = vmatprep.subr.mxu0 0.0
    %526 = vmatpush2.msra.mxu0 0.0
    %527 = vmatprep.subr.mxu0 0.0
    %528 = vmatpush2.msra.mxu0 0.0
    %529 = vmatprep.subr.mxu0 0.0
    %530 = vmatpush2.msra.mxu0 0.0
    %531 = vmatprep.subr.mxu0 0.0
    %532 = vmatpush2.msra.mxu0 0.0
    %533 = vmatprep.subr.mxu0 0.0
    %534 = vmatpush2.msra.mxu0 0.0
    %535 = vmatprep.subr.mxu0 0.0
    %536 = vmatpush2.msra.mxu0 0.0
    %537 = vmatprep.subr.mxu0 0.0
    %538 = vmatpush2.msra.mxu0 0.0
    %539 = vmatprep.mubr.f32.mxu0 0.0
    %540 = vmatmul.mubr.f32.gmra.mxu0 %v473
    %v541 = vpop.f32.mrf.mxu0
    %v542 = vadd.f32 %v84, %v541
    %v543 = vpop.f32.mrf.mxu0
    %544 = vdwg.mxu0
    %s545 = scalar_lea.vmem [#allocation2], 10
    %546 = vst.msk [vmem:[%s545] sm:$0x3] %vm160, %v542
    %s547 = scalar_lea.vmem [#allocation3], 12
    %v548 = vld [vmem:[%s547] sm:$0x3]
    %v550 = vsel %vm86, %v548, 0
    %552 = vmatprep.subr.mxu0 0.0
    %553 = vmatpush1.msra.mxu0 0.0
    %554 = vmatprep.subr.mxu0 0.0
    %555 = vmatpush1.msra.mxu0 0.0
    %556 = vmatprep.subr.mxu0 0.0
    %557 = vmatpush1.msra.mxu0 0.0
    %558 = vmatprep.subr.mxu0 0.0
    %559 = vmatpush1.msra.mxu0 0.0
    %560 = vmatprep.subr.mxu0 0.0
    %561 = vmatpush1.msra.mxu0 0.0
    %562 = vmatprep.subr.mxu0 0.0
    %563 = vmatpush1.msra.mxu0 0.0
    %564 = vmatprep.subr.mxu0 0.0
    %565 = vmatpush1.msra.mxu0 0.0
    %566 = vmatprep.subr.mxu0 0.0
    %567 = vmatpush1.msra.mxu0 0.0
    %568 = vmatprep.subr.mxu0 0.0
    %569 = vmatpush1.msra.mxu0 0.0
    %570 = vmatprep.subr.mxu0 0.0
    %571 = vmatpush1.msra.mxu0 0.0
    %572 = vmatprep.subr.mxu0 0.0
    %573 = vmatpush1.msra.mxu0 0.0
    %574 = vmatprep.subr.mxu0 0.0
    %575 = vmatpush1.msra.mxu0 0.0
    %576 = vmatprep.subr.mxu0 0.0
    %577 = vmatpush1.msra.mxu0 0.0
    %578 = vmatprep.subr.mxu0 0.0
    %579 = vmatpush1.msra.mxu0 0.0
    %580 = vmatprep.subr.mxu0 0.0
    %581 = vmatpush1.msra.mxu0 %v77
    %582 = vmatprep.subr.mxu0 0.0
    %583 = vmatpush1.msra.mxu0 %v76
    %584 = vmatprep.subr.mxu0 0.0
    %585 = vmatpush2.msra.mxu0 0.0
    %586 = vmatprep.subr.mxu0 0.0
    %587 = vmatpush2.msra.mxu0 0.0
    %588 = vmatprep.subr.mxu0 0.0
    %589 = vmatpush2.msra.mxu0 0.0
    %590 = vmatprep.subr.mxu0 0.0
    %591 = vmatpush2.msra.mxu0 0.0
    %592 = vmatprep.subr.mxu0 0.0
    %593 = vmatpush2.msra.mxu0 0.0
    %594 = vmatprep.subr.mxu0 0.0
    %595 = vmatpush2.msra.mxu0 0.0
    %596 = vmatprep.subr.mxu0 0.0
    %597 = vmatpush2.msra.mxu0 0.0
    %598 = vmatprep.subr.mxu0 0.0
    %599 = vmatpush2.msra.mxu0 0.0
    %600 = vmatprep.subr.mxu0 0.0
    %601 = vmatpush2.msra.mxu0 0.0
    %602 = vmatprep.subr.mxu0 0.0
    %603 = vmatpush2.msra.mxu0 0.0
    %604 = vmatprep.subr.mxu0 0.0
    %605 = vmatpush2.msra.mxu0 0.0
    %606 = vmatprep.subr.mxu0 0.0
    %607 = vmatpush2.msra.mxu0 0.0
    %608 = vmatprep.subr.mxu0 0.0
    %609 = vmatpush2.msra.mxu0 0.0
    %610 = vmatprep.subr.mxu0 0.0
    %611 = vmatpush2.msra.mxu0 0.0
    %612 = vmatprep.subr.mxu0 0.0
    %613 = vmatpush2.msra.mxu0 0.0
    %614 = vmatprep.subr.mxu0 0.0
    %615 = vmatpush2.msra.mxu0 0.0
    %616 = vmatprep.mubr.f32.mxu0 0.0
    %617 = vmatmul.mubr.f32.gmra.mxu0 %v550
    %v618 = vpop.f32.mrf.mxu0
    %v619 = vadd.f32 %v84, %v618
    %v620 = vpop.f32.mrf.mxu0
    %621 = vdwg.mxu0
    %s622 = scalar_lea.vmem [#allocation2], 12
    %623 = vst.msk [vmem:[%s622] sm:$0x3] %vm160, %v619
    %s624 = scalar_lea.vmem [#allocation3], 14
    %v625 = vld [vmem:[%s624] sm:$0x3]
    %v627 = vsel %vm86, %v625, 0
    %629 = vmatprep.subr.mxu0 0.0
    %630 = vmatpush1.msra.mxu0 0.0
    %631 = vmatprep.subr.mxu0 0.0
    %632 = vmatpush1.msra.mxu0 0.0
    %633 = vmatprep.subr.mxu0 0.0
    %634 = vmatpush1.msra.mxu0 0.0
    %635 = vmatprep.subr.mxu0 0.0
    %636 = vmatpush1.msra.mxu0 0.0
    %637 = vmatprep.subr.mxu0 0.0
    %638 = vmatpush1.msra.mxu0 0.0
    %639 = vmatprep.subr.mxu0 0.0
    %640 = vmatpush1.msra.mxu0 0.0
    %641 = vmatprep.subr.mxu0 0.0
    %642 = vmatpush1.msra.mxu0 0.0
    %643 = vmatprep.subr.mxu0 0.0
    %644 = vmatpush1.msra.mxu0 0.0
    %645 = vmatprep.subr.mxu0 0.0
    %646 = vmatpush1.msra.mxu0 0.0
    %647 = vmatprep.subr.mxu0 0.0
    %648 = vmatpush1.msra.mxu0 0.0
    %649 = vmatprep.subr.mxu0 0.0
    %650 = vmatpush1.msra.mxu0 0.0
    %651 = vmatprep.subr.mxu0 0.0
    %652 = vmatpush1.msra.mxu0 0.0
    %653 = vmatprep.subr.mxu0 0.0
    %654 = vmatpush1.msra.mxu0 0.0
    %655 = vmatprep.subr.mxu0 0.0
    %656 = vmatpush1.msra.mxu0 0.0
    %657 = vmatprep.subr.mxu0 0.0
    %658 = vmatpush1.msra.mxu0 %v77
    %659 = vmatprep.subr.mxu0 0.0
    %660 = vmatpush1.msra.mxu0 %v76
    %661 = vmatprep.subr.mxu0 0.0
    %662 = vmatpush2.msra.mxu0 0.0
    %663 = vmatprep.subr.mxu0 0.0
    %664 = vmatpush2.msra.mxu0 0.0
    %665 = vmatprep.subr.mxu0 0.0
    %666 = vmatpush2.msra.mxu0 0.0
    %667 = vmatprep.subr.mxu0 0.0
    %668 = vmatpush2.msra.mxu0 0.0
    %669 = vmatprep.subr.mxu0 0.0
    %670 = vmatpush2.msra.mxu0 0.0
    %671 = vmatprep.subr.mxu0 0.0
    %672 = vmatpush2.msra.mxu0 0.0
    %673 = vmatprep.subr.mxu0 0.0
    %674 = vmatpush2.msra.mxu0 0.0
    %675 = vmatprep.subr.mxu0 0.0
    %676 = vmatpush2.msra.mxu0 0.0
    %677 = vmatprep.subr.mxu0 0.0
    %678 = vmatpush2.msra.mxu0 0.0
    %679 = vmatprep.subr.mxu0 0.0
    %680 = vmatpush2.msra.mxu0 0.0
    %681 = vmatprep.subr.mxu0 0.0
    %682 = vmatpush2.msra.mxu0 0.0
    %683 = vmatprep.subr.mxu0 0.0
    %684 = vmatpush2.msra.mxu0 0.0
    %685 = vmatprep.subr.mxu0 0.0
    %686 = vmatpush2.msra.mxu0 0.0
    %687 = vmatprep.subr.mxu0 0.0
    %688 = vmatpush2.msra.mxu0 0.0
    %689 = vmatprep.subr.mxu0 0.0
    %690 = vmatpush2.msra.mxu0 0.0
    %691 = vmatprep.subr.mxu0 0.0
    %692 = vmatpush2.msra.mxu0 0.0
    %693 = vmatprep.mubr.f32.mxu0 0.0
    %694 = vmatmul.mubr.f32.gmra.mxu0 %v627
    %v695 = vpop.f32.mrf.mxu0
    %v696 = vadd.f32 %v84, %v695
    %v697 = vpop.f32.mrf.mxu0
    %698 = vdwg.mxu0
    %s699 = scalar_lea.vmem [#allocation2], 14
    %700 = vst.msk [vmem:[%s699] sm:$0x3] %vm160, %v696
    %v701 = vld [vmem:[#allocation8] sm:$0xff]
    %v702 = vld [vmem:[#allocation8 + $0x8] sm:$0xff]
    %v703 = vld [vmem:[#allocation8 + $0x10] sm:$0xff]
    %v704 = vld [vmem:[#allocation8 + $0x18] sm:$0xff]
    %v705 = vld [vmem:[#allocation2] sm:$0x3]
    %vm706 = vcmask 261120
    %v708 = vsel %vm706, 0.0, 0
    %710 = vmatprep.subr.mxu0 0.0
    %711 = vmatpush1.msra.mxu0 0.0
    %712 = vmatprep.subr.mxu0 0.0
    %713 = vmatpush1.msra.mxu0 0.0
    %714 = vmatprep.subr.mxu0 0.0
    %715 = vmatpush1.msra.mxu0 0.0
    %716 = vmatprep.subr.mxu0 0.0
    %717 = vmatpush1.msra.mxu0 0.0
    %718 = vmatprep.subr.mxu0 0.0
    %719 = vmatpush1.msra.mxu0 0.0
    %720 = vmatprep.subr.mxu0 0.0
    %721 = vmatpush1.msra.mxu0 0.0
    %722 = vmatprep.subr.mxu0 0.0
    %723 = vmatpush1.msra.mxu0 0.0
    %724 = vmatprep.subr.mxu0 0.0
    %725 = vmatpush1.msra.mxu0 0.0
    %726 = vmatprep.subr.mxu0 0.0
    %727 = vmatpush1.msra.mxu0 0.0
    %728 = vmatprep.subr.mxu0 0.0
    %729 = vmatpush1.msra.mxu0 0.0
    %730 = vmatprep.subr.mxu0 0.0
    %731 = vmatpush1.msra.mxu0 0.0
    %732 = vmatprep.subr.mxu0 0.0
    %733 = vmatpush1.msra.mxu0 0.0
    %734 = vmatprep.subr.mxu0 0.0
    %735 = vmatpush1.msra.mxu0 %v704
    %736 = vmatprep.subr.mxu0 0.0
    %737 = vmatpush1.msra.mxu0 %v703
    %738 = vmatprep.subr.mxu0 0.0
    %739 = vmatpush1.msra.mxu0 %v702
    %740 = vmatprep.subr.mxu0 0.0
    %741 = vmatpush1.msra.mxu0 %v701
    %742 = vmatprep.subr.mxu0 0.0
    %743 = vmatpush2.msra.mxu0 0.0
    %744 = vmatprep.subr.mxu0 0.0
    %745 = vmatpush2.msra.mxu0 0.0
    %746 = vmatprep.subr.mxu0 0.0
    %747 = vmatpush2.msra.mxu0 0.0
    %748 = vmatprep.subr.mxu0 0.0
    %749 = vmatpush2.msra.mxu0 0.0
    %750 = vmatprep.subr.mxu0 0.0
    %751 = vmatpush2.msra.mxu0 0.0
    %752 = vmatprep.subr.mxu0 0.0
    %753 = vmatpush2.msra.mxu0 0.0
    %754 = vmatprep.subr.mxu0 0.0
    %755 = vmatpush2.msra.mxu0 0.0
    %756 = vmatprep.subr.mxu0 0.0
    %757 = vmatpush2.msra.mxu0 0.0
    %758 = vmatprep.subr.mxu0 0.0
    %759 = vmatpush2.msra.mxu0 0.0
    %760 = vmatprep.subr.mxu0 0.0
    %761 = vmatpush2.msra.mxu0 0.0
    %762 = vmatprep.subr.mxu0 0.0
    %763 = vmatpush2.msra.mxu0 0.0
    %764 = vmatprep.subr.mxu0 0.0
    %765 = vmatpush2.msra.mxu0 0.0
    %766 = vmatprep.subr.mxu0 0.0
    %767 = vmatpush2.msra.mxu0 0.0
    %768 = vmatprep.subr.mxu0 0.0
    %769 = vmatpush2.msra.mxu0 0.0
    %770 = vmatprep.subr.mxu0 0.0
    %771 = vmatpush2.msra.mxu0 0.0
    %772 = vmatprep.subr.mxu0 0.0
    %773 = vmatpush2.msra.mxu0 0.0
    %774 = vmatprep.mubr.f32.mxu0 0.0
    %775 = vmatmul.mubr.f32.gmra.mxu0 %v708
    %v776 = vpop.f32.mrf.mxu0
    %v777 = vadd.f32 %v705, %v776
    %v778 = vpop.f32.mrf.mxu0
    %779 = vdwg.mxu0
    %v780 = vtanh.pop %v777
    %v781 = vld [vmem:[%s237] sm:$0x3]
    %v783 = vsel %vm706, %v780, 0
    %785 = vmatprep.subr.mxu0 0.0
    %786 = vmatpush1.msra.mxu0 0.0
    %787 = vmatprep.subr.mxu0 0.0
    %788 = vmatpush1.msra.mxu0 0.0
    %789 = vmatprep.subr.mxu0 0.0
    %790 = vmatpush1.msra.mxu0 0.0
    %791 = vmatprep.subr.mxu0 0.0
    %792 = vmatpush1.msra.mxu0 0.0
    %793 = vmatprep.subr.mxu0 0.0
    %794 = vmatpush1.msra.mxu0 0.0
    %795 = vmatprep.subr.mxu0 0.0
    %796 = vmatpush1.msra.mxu0 0.0
    %797 = vmatprep.subr.mxu0 0.0
    %798 = vmatpush1.msra.mxu0 0.0
    %799 = vmatprep.subr.mxu0 0.0
    %800 = vmatpush1.msra.mxu0 0.0
    %801 = vmatprep.subr.mxu0 0.0
    %802 = vmatpush1.msra.mxu0 0.0
    %803 = vmatprep.subr.mxu0 0.0
    %804 = vmatpush1.msra.mxu0 0.0
    %805 = vmatprep.subr.mxu0 0.0
    %806 = vmatpush1.msra.mxu0 0.0
    %807 = vmatprep.subr.mxu0 0.0
    %808 = vmatpush1.msra.mxu0 0.0
    %809 = vmatprep.subr.mxu0 0.0
    %810 = vmatpush1.msra.mxu0 %v704
    %811 = vmatprep.subr.mxu0 0.0
    %812 = vmatpush1.msra.mxu0 %v703
    %813 = vmatprep.subr.mxu0 0.0
    %814 = vmatpush1.msra.mxu0 %v702
    %815 = vmatprep.subr.mxu0 0.0
    %816 = vmatpush1.msra.mxu0 %v701
    %817 = vmatprep.subr.mxu0 0.0
    %818 = vmatpush2.msra.mxu0 0.0
    %819 = vmatprep.subr.mxu0 0.0
    %820 = vmatpush2.msra.mxu0 0.0
    %821 = vmatprep.subr.mxu0 0.0
    %822 = vmatpush2.msra.mxu0 0.0
    %823 = vmatprep.subr.mxu0 0.0
    %824 = vmatpush2.msra.mxu0 0.0
    %825 = vmatprep.subr.mxu0 0.0
    %826 = vmatpush2.msra.mxu0 0.0
    %827 = vmatprep.subr.mxu0 0.0
    %828 = vmatpush2.msra.mxu0 0.0
    %829 = vmatprep.subr.mxu0 0.0
    %830 = vmatpush2.msra.mxu0 0.0
    %831 = vmatprep.subr.mxu0 0.0
    %832 = vmatpush2.msra.mxu0 0.0
    %833 = vmatprep.subr.mxu0 0.0
    %834 = vmatpush2.msra.mxu0 0.0
    %835 = vmatprep.subr.mxu0 0.0
    %836 = vmatpush2.msra.mxu0 0.0
    %837 = vmatprep.subr.mxu0 0.0
    %838 = vmatpush2.msra.mxu0 0.0
    %839 = vmatprep.subr.mxu0 0.0
    %840 = vmatpush2.msra.mxu0 0.0
    %841 = vmatprep.subr.mxu0 0.0
    %842 = vmatpush2.msra.mxu0 0.0
    %843 = vmatprep.subr.mxu0 0.0
    %844 = vmatpush2.msra.mxu0 0.0
    %845 = vmatprep.subr.mxu0 0.0
    %846 = vmatpush2.msra.mxu0 0.0
    %847 = vmatprep.subr.mxu0 0.0
    %848 = vmatpush2.msra.mxu0 0.0
    %849 = vmatprep.mubr.f32.mxu0 0.0
    %850 = vmatmul.mubr.f32.gmra.mxu0 %v783
    %v851 = vpop.f32.mrf.mxu0
    %v852 = vadd.f32 %v781, %v851
    %v853 = vpop.f32.mrf.mxu0
    %854 = vdwg.mxu0
    %v855 = vtanh.pop %v852
    %v856 = vld [vmem:[%s314] sm:$0x3]
    %v858 = vsel %vm706, %v855, 0
    %860 = vmatprep.subr.mxu0 0.0
    %861 = vmatpush1.msra.mxu0 0.0
    %862 = vmatprep.subr.mxu0 0.0
    %863 = vmatpush1.msra.mxu0 0.0
    %864 = vmatprep.subr.mxu0 0.0
    %865 = vmatpush1.msra.mxu0 0.0
    %866 = vmatprep.subr.mxu0 0.0
    %867 = vmatpush1.msra.mxu0 0.0
    %868 = vmatprep.subr.mxu0 0.0
    %869 = vmatpush1.msra.mxu0 0.0
    %870 = vmatprep.subr.mxu0 0.0
    %871 = vmatpush1.msra.mxu0 0.0
    %872 = vmatprep.subr.mxu0 0.0
    %873 = vmatpush1.msra.mxu0 0.0
    %874 = vmatprep.subr.mxu0 0.0
    %875 = vmatpush1.msra.mxu0 0.0
    %876 = vmatprep.subr.mxu0 0.0
    %877 = vmatpush1.msra.mxu0 0.0
    %878 = vmatprep.subr.mxu0 0.0
    %879 = vmatpush1.msra.mxu0 0.0
    %880 = vmatprep.subr.mxu0 0.0
    %881 = vmatpush1.msra.mxu0 0.0
    %882 = vmatprep.subr.mxu0 0.0
    %883 = vmatpush1.msra.mxu0 0.0
    %884 = vmatprep.subr.mxu0 0.0
    %885 = vmatpush1.msra.mxu0 %v704
    %886 = vmatprep.subr.mxu0 0.0
    %887 = vmatpush1.msra.mxu0 %v703
    %888 = vmatprep.subr.mxu0 0.0
    %889 = vmatpush1.msra.mxu0 %v702
    %890 = vmatprep.subr.mxu0 0.0
    %891 = vmatpush1.msra.mxu0 %v701
    %892 = vmatprep.subr.mxu0 0.0
    %893 = vmatpush2.msra.mxu0 0.0
    %894 = vmatprep.subr.mxu0 0.0
    %895 = vmatpush2.msra.mxu0 0.0
    %896 = vmatprep.subr.mxu0 0.0
    %897 = vmatpush2.msra.mxu0 0.0
    %898 = vmatprep.subr.mxu0 0.0
    %899 = vmatpush2.msra.mxu0 0.0
    %900 = vmatprep.subr.mxu0 0.0
    %901 = vmatpush2.msra.mxu0 0.0
    %902 = vmatprep.subr.mxu0 0.0
    %903 = vmatpush2.msra.mxu0 0.0
    %904 = vmatprep.subr.mxu0 0.0
    %905 = vmatpush2.msra.mxu0 0.0
    %906 = vmatprep.subr.mxu0 0.0
    %907 = vmatpush2.msra.mxu0 0.0
    %908 = vmatprep.subr.mxu0 0.0
    %909 = vmatpush2.msra.mxu0 0.0
    %910 = vmatprep.subr.mxu0 0.0
    %911 = vmatpush2.msra.mxu0 0.0
    %912 = vmatprep.subr.mxu0 0.0
    %913 = vmatpush2.msra.mxu0 0.0
    %914 = vmatprep.subr.mxu0 0.0
    %915 = vmatpush2.msra.mxu0 0.0
    %916 = vmatprep.subr.mxu0 0.0
    %917 = vmatpush2.msra.mxu0 0.0
    %918 = vmatprep.subr.mxu0 0.0
    %919 = vmatpush2.msra.mxu0 0.0
    %920 = vmatprep.subr.mxu0 0.0
    %921 = vmatpush2.msra.mxu0 0.0
    %922 = vmatprep.subr.mxu0 0.0
    %923 = vmatpush2.msra.mxu0 0.0
    %924 = vmatprep.mubr.f32.mxu0 0.0
    %925 = vmatmul.mubr.f32.gmra.mxu0 %v858
    %v926 = vpop.f32.mrf.mxu0
    %v927 = vadd.f32 %v856, %v926
    %v928 = vpop.f32.mrf.mxu0
    %929 = vdwg.mxu0
    %v930 = vtanh.pop %v927
    %v931 = vld [vmem:[%s391] sm:$0x3]
    %v933 = vsel %vm706, %v930, 0
    %935 = vmatprep.subr.mxu0 0.0
    %936 = vmatpush1.msra.mxu0 0.0
    %937 = vmatprep.subr.mxu0 0.0
    %938 = vmatpush1.msra.mxu0 0.0
    %939 = vmatprep.subr.mxu0 0.0
    %940 = vmatpush1.msra.mxu0 0.0
    %941 = vmatprep.subr.mxu0 0.0
    %942 = vmatpush1.msra.mxu0 0.0
    %943 = vmatprep.subr.mxu0 0.0
    %944 = vmatpush1.msra.mxu0 0.0
    %945 = vmatprep.subr.mxu0 0.0
    %946 = vmatpush1.msra.mxu0 0.0
    %947 = vmatprep.subr.mxu0 0.0
    %948 = vmatpush1.msra.mxu0 0.0
    %949 = vmatprep.subr.mxu0 0.0
    %950 = vmatpush1.msra.mxu0 0.0
    %951 = vmatprep.subr.mxu0 0.0
    %952 = vmatpush1.msra.mxu0 0.0
    %953 = vmatprep.subr.mxu0 0.0
    %954 = vmatpush1.msra.mxu0 0.0
    %955 = vmatprep.subr.mxu0 0.0
    %956 = vmatpush1.msra.mxu0 0.0
    %957 = vmatprep.subr.mxu0 0.0
    %958 = vmatpush1.msra.mxu0 0.0
    %959 = vmatprep.subr.mxu0 0.0
    %960 = vmatpush1.msra.mxu0 %v704
    %961 = vmatprep.subr.mxu0 0.0
    %962 = vmatpush1.msra.mxu0 %v703
    %963 = vmatprep.subr.mxu0 0.0
    %964 = vmatpush1.msra.mxu0 %v702
    %965 = vmatprep.subr.mxu0 0.0
    %966 = vmatpush1.msra.mxu0 %v701
    %967 = vmatprep.subr.mxu0 0.0
    %968 = vmatpush2.msra.mxu0 0.0
    %969 = vmatprep.subr.mxu0 0.0
    %970 = vmatpush2.msra.mxu0 0.0
    %971 = vmatprep.subr.mxu0 0.0
    %972 = vmatpush2.msra.mxu0 0.0
    %973 = vmatprep.subr.mxu0 0.0
    %974 = vmatpush2.msra.mxu0 0.0
    %975 = vmatprep.subr.mxu0 0.0
    %976 = vmatpush2.msra.mxu0 0.0
    %977 = vmatprep.subr.mxu0 0.0
    %978 = vmatpush2.msra.mxu0 0.0
    %979 = vmatprep.subr.mxu0 0.0
    %980 = vmatpush2.msra.mxu0 0.0
    %981 = vmatprep.subr.mxu0 0.0
    %982 = vmatpush2.msra.mxu0 0.0
    %983 = vmatprep.subr.mxu0 0.0
    %984 = vmatpush2.msra.mxu0 0.0
    %985 = vmatprep.subr.mxu0 0.0
    %986 = vmatpush2.msra.mxu0 0.0
    %987 = vmatprep.subr.mxu0 0.0
    %988 = vmatpush2.msra.mxu0 0.0
    %989 = vmatprep.subr.mxu0 0.0
    %990 = vmatpush2.msra.mxu0 0.0
    %991 = vmatprep.subr.mxu0 0.0
    %992 = vmatpush2.msra.mxu0 0.0
    %993 = vmatprep.subr.mxu0 0.0
    %994 = vmatpush2.msra.mxu0 0.0
    %995 = vmatprep.subr.mxu0 0.0
    %996 = vmatpush2.msra.mxu0 0.0
    %997 = vmatprep.subr.mxu0 0.0
    %998 = vmatpush2.msra.mxu0 0.0
    %999 = vmatprep.mubr.f32.mxu0 0.0
    %1000 = vmatmul.mubr.f32.gmra.mxu0 %v933
    %v1001 = vpop.f32.mrf.mxu0
    %v1002 = vadd.f32 %v931, %v1001
    %v1003 = vpop.f32.mrf.mxu0
    %1004 = vdwg.mxu0
    %v1005 = vtanh.pop %v1002
    %v1006 = vld [vmem:[%s468] sm:$0x3]
    %v1008 = vsel %vm706, %v1005, 0
    %1010 = vmatprep.subr.mxu0 0.0
    %1011 = vmatpush1.msra.mxu0 0.0
    %1012 = vmatprep.subr.mxu0 0.0
    %1013 = vmatpush1.msra.mxu0 0.0
    %1014 = vmatprep.subr.mxu0 0.0
    %1015 = vmatpush1.msra.mxu0 0.0
    %1016 = vmatprep.subr.mxu0 0.0
    %1017 = vmatpush1.msra.mxu0 0.0
    %1018 = vmatprep.subr.mxu0 0.0
    %1019 = vmatpush1.msra.mxu0 0.0
    %1020 = vmatprep.subr.mxu0 0.0
    %1021 = vmatpush1.msra.mxu0 0.0
    %1022 = vmatprep.subr.mxu0 0.0
    %1023 = vmatpush1.msra.mxu0 0.0
    %1024 = vmatprep.subr.mxu0 0.0
    %1025 = vmatpush1.msra.mxu0 0.0
    %1026 = vmatprep.subr.mxu0 0.0
    %1027 = vmatpush1.msra.mxu0 0.0
    %1028 = vmatprep.subr.mxu0 0.0
    %1029 = vmatpush1.msra.mxu0 0.0
    %1030 = vmatprep.subr.mxu0 0.0
    %1031 = vmatpush1.msra.mxu0 0.0
    %1032 = vmatprep.subr.mxu0 0.0
    %1033 = vmatpush1.msra.mxu0 0.0
    %1034 = vmatprep.subr.mxu0 0.0
    %1035 = vmatpush1.msra.mxu0 %v704
    %1036 = vmatprep.subr.mxu0 0.0
    %1037 = vmatpush1.msra.mxu0 %v703
    %1038 = vmatprep.subr.mxu0 0.0
    %1039 = vmatpush1.msra.mxu0 %v702
    %1040 = vmatprep.subr.mxu0 0.0
    %1041 = vmatpush1.msra.mxu0 %v701
    %1042 = vmatprep.subr.mxu0 0.0
    %1043 = vmatpush2.msra.mxu0 0.0
    %1044 = vmatprep.subr.mxu0 0.0
    %1045 = vmatpush2.msra.mxu0 0.0
    %1046 = vmatprep.subr.mxu0 0.0
    %1047 = vmatpush2.msra.mxu0 0.0
    %1048 = vmatprep.subr.mxu0 0.0
    %1049 = vmatpush2.msra.mxu0 0.0
    %1050 = vmatprep.subr.mxu0 0.0
    %1051 = vmatpush2.msra.mxu0 0.0
    %1052 = vmatprep.subr.mxu0 0.0
    %1053 = vmatpush2.msra.mxu0 0.0
    %1054 = vmatprep.subr.mxu0 0.0
    %1055 = vmatpush2.msra.mxu0 0.0
    %1056 = vmatprep.subr.mxu0 0.0
    %1057 = vmatpush2.msra.mxu0 0.0
    %1058 = vmatprep.subr.mxu0 0.0
    %1059 = vmatpush2.msra.mxu0 0.0
    %1060 = vmatprep.subr.mxu0 0.0
    %1061 = vmatpush2.msra.mxu0 0.0
    %1062 = vmatprep.subr.mxu0 0.0
    %1063 = vmatpush2.msra.mxu0 0.0
    %1064 = vmatprep.subr.mxu0 0.0
    %1065 = vmatpush2.msra.mxu0 0.0
    %1066 = vmatprep.subr.mxu0 0.0
    %1067 = vmatpush2.msra.mxu0 0.0
    %1068 = vmatprep.subr.mxu0 0.0
    %1069 = vmatpush2.msra.mxu0 0.0
    %1070 = vmatprep.subr.mxu0 0.0
    %1071 = vmatpush2.msra.mxu0 0.0
    %1072 = vmatprep.subr.mxu0 0.0
    %1073 = vmatpush2.msra.mxu0 0.0
    %1074 = vmatprep.mubr.f32.mxu0 0.0
    %1075 = vmatmul.mubr.f32.gmra.mxu0 %v1008
    %v1076 = vpop.f32.mrf.mxu0
    %v1077 = vadd.f32 %v1006, %v1076
    %v1078 = vpop.f32.mrf.mxu0
    %1079 = vdwg.mxu0
    %v1080 = vtanh.pop %v1077
    %v1081 = vld [vmem:[%s545] sm:$0x3]
    %v1083 = vsel %vm706, %v1080, 0
    %1085 = vmatprep.subr.mxu0 0.0
    %1086 = vmatpush1.msra.mxu0 0.0
    %1087 = vmatprep.subr.mxu0 0.0
    %1088 = vmatpush1.msra.mxu0 0.0
    %1089 = vmatprep.subr.mxu0 0.0
    %1090 = vmatpush1.msra.mxu0 0.0
    %1091 = vmatprep.subr.mxu0 0.0
    %1092 = vmatpush1.msra.mxu0 0.0
    %1093 = vmatprep.subr.mxu0 0.0
    %1094 = vmatpush1.msra.mxu0 0.0
    %1095 = vmatprep.subr.mxu0 0.0
    %1096 = vmatpush1.msra.mxu0 0.0
    %1097 = vmatprep.subr.mxu0 0.0
    %1098 = vmatpush1.msra.mxu0 0.0
    %1099 = vmatprep.subr.mxu0 0.0
    %1100 = vmatpush1.msra.mxu0 0.0
    %1101 = vmatprep.subr.mxu0 0.0
    %1102 = vmatpush1.msra.mxu0 0.0
    %1103 = vmatprep.subr.mxu0 0.0
    %1104 = vmatpush1.msra.mxu0 0.0
    %1105 = vmatprep.subr.mxu0 0.0
    %1106 = vmatpush1.msra.mxu0 0.0
    %1107 = vmatprep.subr.mxu0 0.0
    %1108 = vmatpush1.msra.mxu0 0.0
    %1109 = vmatprep.subr.mxu0 0.0
    %1110 = vmatpush1.msra.mxu0 %v704
    %1111 = vmatprep.subr.mxu0 0.0
    %1112 = vmatpush1.msra.mxu0 %v703
    %1113 = vmatprep.subr.mxu0 0.0
    %1114 = vmatpush1.msra.mxu0 %v702
    %1115 = vmatprep.subr.mxu0 0.0
    %1116 = vmatpush1.msra.mxu0 %v701
    %1117 = vmatprep.subr.mxu0 0.0
    %1118 = vmatpush2.msra.mxu0 0.0
    %1119 = vmatprep.subr.mxu0 0.0
    %1120 = vmatpush2.msra.mxu0 0.0
    %1121 = vmatprep.subr.mxu0 0.0
    %1122 = vmatpush2.msra.mxu0 0.0
    %1123 = vmatprep.subr.mxu0 0.0
    %1124 = vmatpush2.msra.mxu0 0.0
    %1125 = vmatprep.subr.mxu0 0.0
    %1126 = vmatpush2.msra.mxu0 0.0
    %1127 = vmatprep.subr.mxu0 0.0
    %1128 = vmatpush2.msra.mxu0 0.0
    %1129 = vmatprep.subr.mxu0 0.0
    %1130 = vmatpush2.msra.mxu0 0.0
    %1131 = vmatprep.subr.mxu0 0.0
    %1132 = vmatpush2.msra.mxu0 0.0
    %1133 = vmatprep.subr.mxu0 0.0
    %1134 = vmatpush2.msra.mxu0 0.0
    %1135 = vmatprep.subr.mxu0 0.0
    %1136 = vmatpush2.msra.mxu0 0.0
    %1137 = vmatprep.subr.mxu0 0.0
    %1138 = vmatpush2.msra.mxu0 0.0
    %1139 = vmatprep.subr.mxu0 0.0
    %1140 = vmatpush2.msra.mxu0 0.0
    %1141 = vmatprep.subr.mxu0 0.0
    %1142 = vmatpush2.msra.mxu0 0.0
    %1143 = vmatprep.subr.mxu0 0.0
    %1144 = vmatpush2.msra.mxu0 0.0
    %1145 = vmatprep.subr.mxu0 0.0
    %1146 = vmatpush2.msra.mxu0 0.0
    %1147 = vmatprep.subr.mxu0 0.0
    %1148 = vmatpush2.msra.mxu0 0.0
    %1149 = vmatprep.mubr.f32.mxu0 0.0
    %1150 = vmatmul.mubr.f32.gmra.mxu0 %v1083
    %v1151 = vpop.f32.mrf.mxu0
    %v1152 = vadd.f32 %v1081, %v1151
    %v1153 = vpop.f32.mrf.mxu0
    %1154 = vdwg.mxu0
    %v1155 = vtanh.pop %v1152
    %v1156 = vld [vmem:[%s622] sm:$0x3]
    %v1158 = vsel %vm706, %v1155, 0
    %1160 = vmatprep.subr.mxu0 0.0
    %1161 = vmatpush1.msra.mxu0 0.0
    %1162 = vmatprep.subr.mxu0 0.0
    %1163 = vmatpush1.msra.mxu0 0.0
    %1164 = vmatprep.subr.mxu0 0.0
    %1165 = vmatpush1.msra.mxu0 0.0
    %1166 = vmatprep.subr.mxu0 0.0
    %1167 = vmatpush1.msra.mxu0 0.0
    %1168 = vmatprep.subr.mxu0 0.0
    %1169 = vmatpush1.msra.mxu0 0.0
    %1170 = vmatprep.subr.mxu0 0.0
    %1171 = vmatpush1.msra.mxu0 0.0
    %1172 = vmatprep.subr.mxu0 0.0
    %1173 = vmatpush1.msra.mxu0 0.0
    %1174 = vmatprep.subr.mxu0 0.0
    %1175 = vmatpush1.msra.mxu0 0.0
    %1176 = vmatprep.subr.mxu0 0.0
    %1177 = vmatpush1.msra.mxu0 0.0
    %1178 = vmatprep.subr.mxu0 0.0
    %1179 = vmatpush1.msra.mxu0 0.0
    %1180 = vmatprep.subr.mxu0 0.0
    %1181 = vmatpush1.msra.mxu0 0.0
    %1182 = vmatprep.subr.mxu0 0.0
    %1183 = vmatpush1.msra.mxu0 0.0
    %1184 = vmatprep.subr.mxu0 0.0
    %1185 = vmatpush1.msra.mxu0 %v704
    %1186 = vmatprep.subr.mxu0 0.0
    %1187 = vmatpush1.msra.mxu0 %v703
    %1188 = vmatprep.subr.mxu0 0.0
    %1189 = vmatpush1.msra.mxu0 %v702
    %1190 = vmatprep.subr.mxu0 0.0
    %1191 = vmatpush1.msra.mxu0 %v701
    %1192 = vmatprep.subr.mxu0 0.0
    %1193 = vmatpush2.msra.mxu0 0.0
    %1194 = vmatprep.subr.mxu0 0.0
    %1195 = vmatpush2.msra.mxu0 0.0
    %1196 = vmatprep.subr.mxu0 0.0
    %1197 = vmatpush2.msra.mxu0 0.0
    %1198 = vmatprep.subr.mxu0 0.0
    %1199 = vmatpush2.msra.mxu0 0.0
    %1200 = vmatprep.subr.mxu0 0.0
    %1201 = vmatpush2.msra.mxu0 0.0
    %1202 = vmatprep.subr.mxu0 0.0
    %1203 = vmatpush2.msra.mxu0 0.0
    %1204 = vmatprep.subr.mxu0 0.0
    %1205 = vmatpush2.msra.mxu0 0.0
    %1206 = vmatprep.subr.mxu0 0.0
    %1207 = vmatpush2.msra.mxu0 0.0
    %1208 = vmatprep.subr.mxu0 0.0
    %1209 = vmatpush2.msra.mxu0 0.0
    %1210 = vmatprep.subr.mxu0 0.0
    %1211 = vmatpush2.msra.mxu0 0.0
    %1212 = vmatprep.subr.mxu0 0.0
    %1213 = vmatpush2.msra.mxu0 0.0
    %1214 = vmatprep.subr.mxu0 0.0
    %1215 = vmatpush2.msra.mxu0 0.0
    %1216 = vmatprep.subr.mxu0 0.0
    %1217 = vmatpush2.msra.mxu0 0.0
    %1218 = vmatprep.subr.mxu0 0.0
    %1219 = vmatpush2.msra.mxu0 0.0
    %1220 = vmatprep.subr.mxu0 0.0
    %1221 = vmatpush2.msra.mxu0 0.0
    %1222 = vmatprep.subr.mxu0 0.0
    %1223 = vmatpush2.msra.mxu0 0.0
    %1224 = vmatprep.mubr.f32.mxu0 0.0
    %1225 = vmatmul.mubr.f32.gmra.mxu0 %v1158
    %v1226 = vpop.f32.mrf.mxu0
    %v1227 = vadd.f32 %v1156, %v1226
    %v1228 = vpop.f32.mrf.mxu0
    %1229 = vdwg.mxu0
    %v1230 = vtanh.pop %v1227
    %v1231 = vld [vmem:[%s699] sm:$0x3]
    %v1233 = vsel %vm706, %v1230, 0
    %1235 = vmatprep.subr.mxu0 0.0
    %1236 = vmatpush1.msra.mxu0 0.0
    %1237 = vmatprep.subr.mxu0 0.0
    %1238 = vmatpush1.msra.mxu0 0.0
    %1239 = vmatprep.subr.mxu0 0.0
    %1240 = vmatpush1.msra.mxu0 0.0
    %1241 = vmatprep.subr.mxu0 0.0
    %1242 = vmatpush1.msra.mxu0 0.0
    %1243 = vmatprep.subr.mxu0 0.0
    %1244 = vmatpush1.msra.mxu0 0.0
    %1245 = vmatprep.subr.mxu0 0.0
    %1246 = vmatpush1.msra.mxu0 0.0
    %1247 = vmatprep.subr.mxu0 0.0
    %1248 = vmatpush1.msra.mxu0 0.0
    %1249 = vmatprep.subr.mxu0 0.0
    %1250 = vmatpush1.msra.mxu0 0.0
    %1251 = vmatprep.subr.mxu0 0.0
    %1252 = vmatpush1.msra.mxu0 0.0
    %1253 = vmatprep.subr.mxu0 0.0
    %1254 = vmatpush1.msra.mxu0 0.0
    %1255 = vmatprep.subr.mxu0 0.0
    %1256 = vmatpush1.msra.mxu0 0.0
    %1257 = vmatprep.subr.mxu0 0.0
    %1258 = vmatpush1.msra.mxu0 0.0
    %1259 = vmatprep.subr.mxu0 0.0
    %1260 = vmatpush1.msra.mxu0 %v704
    %1261 = vmatprep.subr.mxu0 0.0
    %1262 = vmatpush1.msra.mxu0 %v703
    %1263 = vmatprep.subr.mxu0 0.0
    %1264 = vmatpush1.msra.mxu0 %v702
    %1265 = vmatprep.subr.mxu0 0.0
    %1266 = vmatpush1.msra.mxu0 %v701
    %1267 = vmatprep.subr.mxu0 0.0
    %1268 = vmatpush2.msra.mxu0 0.0
    %1269 = vmatprep.subr.mxu0 0.0
    %1270 = vmatpush2.msra.mxu0 0.0
    %1271 = vmatprep.subr.mxu0 0.0
    %1272 = vmatpush2.msra.mxu0 0.0
    %1273 = vmatprep.subr.mxu0 0.0
    %1274 = vmatpush2.msra.mxu0 0.0
    %1275 = vmatprep.subr.mxu0 0.0
    %1276 = vmatpush2.msra.mxu0 0.0
    %1277 = vmatprep.subr.mxu0 0.0
    %1278 = vmatpush2.msra.mxu0 0.0
    %1279 = vmatprep.subr.mxu0 0.0
    %1280 = vmatpush2.msra.mxu0 0.0
    %1281 = vmatprep.subr.mxu0 0.0
    %1282 = vmatpush2.msra.mxu0 0.0
    %1283 = vmatprep.subr.mxu0 0.0
    %1284 = vmatpush2.msra.mxu0 0.0
    %1285 = vmatprep.subr.mxu0 0.0
    %1286 = vmatpush2.msra.mxu0 0.0
    %1287 = vmatprep.subr.mxu0 0.0
    %1288 = vmatpush2.msra.mxu0 0.0
    %1289 = vmatprep.subr.mxu0 0.0
    %1290 = vmatpush2.msra.mxu0 0.0
    %1291 = vmatprep.subr.mxu0 0.0
    %1292 = vmatpush2.msra.mxu0 0.0
    %1293 = vmatprep.subr.mxu0 0.0
    %1294 = vmatpush2.msra.mxu0 0.0
    %1295 = vmatprep.subr.mxu0 0.0
    %1296 = vmatpush2.msra.mxu0 0.0
    %1297 = vmatprep.subr.mxu0 0.0
    %1298 = vmatpush2.msra.mxu0 0.0
    %1299 = vmatprep.mubr.f32.mxu0 0.0
    %1300 = vmatmul.mubr.f32.gmra.mxu0 %v1233
    %v1301 = vpop.f32.mrf.mxu0
    %v1302 = vadd.f32 %v1231, %v1301
    %v1303 = vpop.f32.mrf.mxu0
    %1304 = vdwg.mxu0
    %v1305 = vtanh.pop %v1302
    %v1306 = vld [vmem:[#allocation9] sm:$0xff]
    %v1307 = vld [vmem:[#allocation9 + $0x8] sm:$0xff]
    %v1310 = vunpack.c.l.s4 1966171168
    %v1311 = vunpack.c.0.s8 %v1310
    %v1312 = vlaneseq
    %v1313 = vshrl.u32 %v1312, 7
    %v1314 = vsub.s32 %v1311, %v1313
    %v1315 = vrot.slane %v1305, %v1314
    %v1316 = vcombine.high %v1315, %v1315
    %v1318 = vunpack.c.l.s4 1966171168
    %v1319 = vunpack.c.0.s8 %v1318
    %v1320 = vlaneseq
    %v1321 = vshrl.u32 %v1320, 7
    %v1322 = vsub.s32 %v1319, %v1321
    %v1323 = vrot.slane %v1315, %v1322
    %v1325 = vunpack.c.l.s4 1966171168
    %v1326 = vunpack.c.0.s8 %v1325
    %v1327 = vlaneseq
    %v1328 = vshrl.u32 %v1327, 7
    %v1329 = vsub.s32 %v1326, %v1328
    %v1330 = vrot.slane %v1316, %v1329
    %v1331 = vlaneseq
    %v1332 = vshrl.u32 %v1331, 7
    %v1333 = vsub.s32 0, %v1332
    %v1334 = vrot.slane %v1323, %v1333
    %v1335 = vlaneseq
    %v1336 = vshrl.u32 %v1335, 7
    %v1337 = vsub.s32 0, %v1336
    %v1338 = vrot.slane %v1330, %v1337
    %v1341 = vmul.f32 %v1334, %v1306
    %v1342 = vmul.f32 %v1338, %v1307
    %v1343 = vsel %vm706, %v1341, 0.0
    %1344 = vadd.xlane.f32.xlu0 %v1343
    %v1345 = vpop.xlane.xlu0 %1344
    %v1346 = vsel %vm706, %v1342, 0.0
    %1347 = vadd.xlane.f32.xlu0 %v1346
    %v1348 = vpop.xlane.xlu0 %1347
    %v1351 = vlaneseq
    %v1352 = vand.u32 %v1351, 127
    %v1353 = vlaneseq
    %v1354 = vshrl.u32 %v1353, 7
    %v1355 = vsub.s32 %v1352, %v1354
    %v1356 = vrot.slane %v1345, %v1355
    %v1357 = vlaneseq
    %v1358 = vshrl.u32 %v1357, 7
    %v1359 = vsub.s32 %v1352, %v1358
    %v1360 = vrot.slane %v1348, %v1359
    %vm1361 = vcmask 1041409
    %v1362 = vsel %vm1361, %v1360, %v1356
    %vm1364 = vcmask 58368
    %v1365 = vsel %vm1364, %v1362, -inf
    %1366 = vmax.xlane.f32.xlu0 %v1365
    %v1367 = vpop.xlane.xlu0 %1366
    %v1369 = vlaneseq
    %v1370 = vshrl.u32 %v1369, 7
    %v1371 = vsub.s32 0, %v1370
    %v1372 = vrot.slane %v1367, %v1371
    %v1373 = vlaneseq
    %v1374 = vshrl.u32 %v1373, 7
    %v1375 = vsub.s32 1, %v1374
    %v1376 = vrot.slane %v1367, %v1375
    %v1379 = vsub.f32 %v1345, %v1372
    %v1380 = vsub.f32 %v1348, %v1376
    %v1381 = vmul.f32 %v1379, 1.442695
    %v1382 = vpow.pop %v1381
    %v1383 = vmul.f32 %v1380, 1.442695
    %v1384 = vpow.pop %v1383
    %1387 = vset.pattern.permute.xlu0 0
    %1388 = vperm.xlu0 %1387, %v1382
    %v1389 = vpop.permute.xlu0 %1388
    %1390 = vset.pattern.permute.xlu0 0
    %1391 = vperm.xlu0 %1390, %v1384
    %v1392 = vpop.permute.xlu0 %1391
    %v1393 = vlaneseq
    %v1394 = vshrl.u32 %v1393, 7
    %v1395 = vsub.s32 %v1352, %v1394
    %v1396 = vrot.slane %v1389, %v1395
    %v1397 = vlaneseq
    %v1398 = vshrl.u32 %v1397, 7
    %v1399 = vsub.s32 %v1352, %v1398
    %v1400 = vrot.slane %v1392, %v1399
    %v1401 = vsel %vm1361, %v1400, %v1396
    %v1403 = vsel %vm1364, %v1401, 0.0
    %1404 = vadd.xlane.f32.xlu0 %v1403
    %v1405 = vpop.xlane.xlu0 %1404
    %v1407 = vlaneseq
    %v1408 = vshrl.u32 %v1407, 7
    %v1409 = vsub.s32 0, %v1408
    %v1410 = vrot.slane %v1405, %v1409
    %v1411 = vlaneseq
    %v1412 = vshrl.u32 %v1411, 7
    %v1413 = vsub.s32 1, %v1412
    %v1414 = vrot.slane %v1405, %v1413
    %v1417 = vrcp.pop %v1410
    %v1418 = vmul.f32 %v1382, %v1417
    %v1419 = vrcp.pop %v1414
    %v1420 = vmul.f32 %v1384, %v1419
    %1423 = vset.pattern.permute.xlu0 0
    %1424 = vperm.xlu0 %1423, %v1418
    %v1425 = vpop.permute.xlu0 %1424
    %1426 = vset.pattern.permute.xlu0 0
    %1427 = vperm.xlu0 %1426, %v1420
    %v1428 = vpop.permute.xlu0 %1427
    %v1429 = vlaneseq
    %v1430 = vshrl.u32 %v1429, 7
    %v1431 = vsub.s32 %v1352, %v1430
    %v1432 = vrot.slane %v1425, %v1431
    %v1433 = vlaneseq
    %v1434 = vshrl.u32 %v1433, 7
    %v1435 = vsub.s32 %v1352, %v1434
    %v1436 = vrot.slane %v1428, %v1435
    %v1437 = vsel %vm1361, %v1436, %v1432
    %1439 = vst.msk [vmem:[#allocation11] sm:$0x3] %vm1364, %v1437
    // Predicated region
    $region38: #{tpu_custom_call.1} parent=1 // pred_check
      _
    $region39: #{tpu_custom_call.1} parent=1 // pred_check_branch
      %1441 = sbr.rel (0) target = $region41
    $region40: #{tpu_custom_call.1} parent=1 // pred_region
      %s1443 = ssub.s32 32, 32
      %1444 = vsyncadd [#allocation5], %s1443
      %s1446 = sshll.u32 [#allocation11], 4
      %s1447 = int_to_ptr.vmem [resolvable:$true] %s1446
      %1449 = dma.vmem_to_hbm [thread:$0]  %s1447, 32, %s5, [#allocation5]
    $region41: #{tpu_custom_call.1} parent=1 // pred_fallthru
      _
    // Predicated region
    $region42: #{tpu_custom_call.1} parent=1 // pred_check
      _
    $region43: #{tpu_custom_call.1} parent=1 // pred_check_branch
      %1451 = sbr.rel (0) target = $region45
    $region44: #{tpu_custom_call.1} parent=1 // pred_region
      %1452 = dma.done [#allocation5], 32
    $region45: #{tpu_custom_call.1} parent=1 // pred_fallthru
      _
    %1453 = vsyncpa [#allocation4], 1
    %1454 = vsyncpa [#allocation7], 1
    %1455 = vsyncpa [#allocation10], 1
    %1456 = vsyncpa [#allocation5], 1

</llo_original>
